<compile_context>
chip_gen: v7x
topology: tpu7x:2x2x1
jax: 0.10.0
libtpu: 0.0.40
codegen_flags: <defaults>
</compile_context>

<pallas_src>
import jax
import jax.numpy as jnp
from jax.experimental import pallas as pl
from jax.experimental.pallas import tpu as pltpu

_LANE = 128


def _round_up(x, m):
    return ((x + m - 1) // m) * m


def _vmem_limit_bytes():
    """Generation-aware VMEM budget: ~75% of physical, capped at 100 MiB."""
    cap = 64 * 1024 * 1024          # conservative fallback (v7x per-TC)
    try:
        info = pltpu.get_tpu_info()
        cap = getattr(info, "vmem_capacity_bytes", cap) or cap
    except Exception:
        pass
    return min(int(cap * 3 // 4), 100 * 1024 * 1024)


def _pick_node_tiles(n):
    """(row_tile tm, reduction_tile tk, padded node count n_pad).

    All tiles are multiples of 128 (lane-dense, int8/bf16 sublane friendly);
    n_pad is divisible by both tm and tk.  For mid-size graphs we keep at
    least two row tiles so the 'parallel' axis can span both v7x TCs.
    """
    if n <= 256:
        n_pad = _round_up(n, _LANE)
        tm = tk = n_pad                       # single-tile tiny graph
    elif n <= 1024:
        n_pad = _round_up(n, 256)
        tm, tk = n_pad // 2, n_pad            # 2 row tiles, full-width k
    else:
        n_pad = _round_up(n, 512)
        tm, tk = 512, min(n_pad, 2048)
        while n_pad % tk:                     # keep divisibility (>= 512)
            tk //= 2
    return tm, tk, n_pad


def _pad2(a, shape):
    return jnp.pad(a, [(0, s - d) for s, d in zip(shape, a.shape)])


# ---------------------------------------------------------------------------
# Kernel 1: projection   P = d_src[:, None] * (H @ W)
# ---------------------------------------------------------------------------
def _project_kernel(h_ref, w_ref, d_ref, p_ref):
    hw = jnp.dot(h_ref[...], w_ref[...], preferred_element_type=jnp.float32)
    p_ref[...] = (d_ref[...] * hw).astype(p_ref.dtype)


def _project(h, w, d_src, *, tm, vmem_limit):
    n_pad, f_in = h.shape
    f_out = w.shape[1]
    cost = pl.CostEstimate(
        flops=2 * n_pad * f_in * f_out,
        transcendentals=0,
        bytes_accessed=(h.size * h.dtype.itemsize + w.size * w.dtype.itemsize
                        + n_pad * 4 + n_pad * f_out * 2),
    )
    return pl.pallas_call(
        _project_kernel,
        out_shape=jax.ShapeDtypeStruct((n_pad, f_out), jnp.bfloat16),
        grid_spec=pltpu.PrefetchScalarGridSpec(
            num_scalar_prefetch=0,
            grid=(n_pad // tm,),
            in_specs=[
                pl.BlockSpec((tm, f_in), lambda i: (i, 0)),
                pl.BlockSpec((f_in, f_out), lambda i: (0, 0)),
                pl.BlockSpec((tm, 1), lambda i: (i, 0)),
            ],
            out_specs=pl.BlockSpec((tm, f_out), lambda i: (i, 0)),
        ),
        compiler_params=pltpu.CompilerParams(
            dimension_semantics=("parallel",),
            vmem_limit_bytes=vmem_limit,
        ),
        cost_estimate=cost,
    )(h, w, d_src)


# ---------------------------------------------------------------------------
# Kernel 2: aggregation   O = act(d_dst[:, None] * (A @ P) + b)  [@ W2 fused]
# ---------------------------------------------------------------------------
def _aggregate(a_i8, p, d_dst, bias, *, tm, tk, apply_relu, out_dtype,
               w2=None, vmem_limit):
    """O = act(d * (A @ P) + b); if w2 is given, additionally O = d * (O @ w2).

    A streams in as int8 tiles (upcast to bf16 on the VPU); P is VMEM-resident
    when it fits; accumulation in a f32 VMEM scratch over the k grid axis.
    """
    n_pad = a_i8.shape[0]
    f_p = p.shape[1]
    f_out = w2.shape[1] if w2 is not None else f_p
    out_bytes = jnp.dtype(out_dtype).itemsize

    p_bytes = n_pad * f_p * p.dtype.itemsize
    p_resident = p_bytes <= min(16 * 1024 * 1024, vmem_limit // 3)

    if p_resident:
        p_spec = pl.BlockSpec((n_pad, f_p), lambda i, k: (0, 0))
        p_traffic = p_bytes                             # DMA'd once
    else:
        p_spec = pl.BlockSpec((tk, f_p), lambda i, k: (k, 0))
        p_traffic = (n_pad // tm) * p_bytes             # re-fetched per row tile

    def body(a_ref, p_ref, d_ref, b_ref, w2_ref, o_ref, acc_ref):
        k = pl.program_id(1)

        @pl.when(k == 0)
        def _():
            acc_ref[...] = jnp.zeros_like(acc_ref)

        if p_resident:
            off = pl.multiple_of(k * tk, tk)
            p_blk = p_ref[pl.ds(off, tk), :]
        else:
            p_blk = p_ref[...]

        # int8 {0,1} adjacency tile -> bf16 on the VPU (kernel is DMA-bound,
        # the upcast rides on otherwise-idle VALU slots).
        a_blk = a_ref[...].astype(jnp.bfloat16)
        acc_ref[...] += jnp.dot(a_blk, p_blk,
                                preferred_element_type=jnp.float32)

        @pl.when(k == pl.num_programs(1) - 1)
        def _():
            out = d_ref[...] * acc_ref[...] + b_ref[...]
            if apply_relu:
                out = jnp.maximum(out, 0.0)
            if w2_ref is not None:
                # Fused next-layer projection: p2 = d * (h1 @ W2)
                out = d_ref[...] * jnp.dot(out.astype(jnp.bfloat16),
                                           w2_ref[...],
                                           preferred_element_type=jnp.float32)
            o_ref[...] = out.astype(o_ref.dtype)

    base_specs = [
        pl.BlockSpec((tm, tk), lambda i, k: (i, k)),        # A tile (int8)
        p_spec,                                             # P (resident or k-tile)
        pl.BlockSpec((tm, 1), lambda i, k: (i, 0)),         # d^{-1/2} rows
        pl.BlockSpec((1, f_p), lambda i, k: (0, 0)),        # bias
    ]
    flops = 2 * n_pad * n_pad * f_p
    bytes_acc = (n_pad * n_pad * 1 + p_traffic
                 + n_pad * 4 + f_p * 4 + n_pad * f_out * out_bytes)

    if w2 is None:
        def kernel(a_ref, p_ref, d_ref, b_ref, o_ref, acc_ref):
            body(a_ref, p_ref, d_ref, b_ref, None, o_ref, acc_ref)
        in_specs = base_specs
        inputs = (a_i8, p, d_dst, bias)
    else:
        def kernel(a_ref, p_ref, d_ref, b_ref, w2_ref, o_ref, acc_ref):
            body(a_ref, p_ref, d_ref, b_ref, w2_ref, o_ref, acc_ref)
        in_specs = base_specs + [pl.BlockSpec((f_p, f_out), lambda i, k: (0, 0))]
        inputs = (a_i8, p, d_dst, bias, w2)
        flops += 2 * n_pad * f_p * f_out
        bytes_acc += f_p * f_out * 2

    cost = pl.CostEstimate(flops=flops, transcendentals=0,
                           bytes_accessed=bytes_acc)

    return pl.pallas_call(
        kernel,
        out_shape=jax.ShapeDtypeStruct((n_pad, f_out), out_dtype),
        grid_spec=pltpu.PrefetchScalarGridSpec(
            num_scalar_prefetch=0,
            grid=(n_pad // tm, n_pad // tk),
            in_specs=in_specs,
            out_specs=pl.BlockSpec((tm, f_out), lambda i, k: (i, 0)),
            scratch_shapes=[pltpu.VMEM((tm, f_p), jnp.float32)],
        ),
        compiler_params=pltpu.CompilerParams(
            dimension_semantics=("parallel", "arbitrary"),
            vmem_limit_bytes=vmem_limit,
        ),
        cost_estimate=cost,
    )(*inputs)


# ---------------------------------------------------------------------------
# Full GCN forward (GraphConv -> relu -> GraphConv) on the raw adjacency.
# ---------------------------------------------------------------------------
def gcn_forward(adj, x, w1, b1, w2, b2):
    n = adj.shape[0]
    in_feats, hidden = w1.shape
    num_classes = w2.shape[1]

    tm, tk, n_pad = _pick_node_tiles(n)
    fin_p = _round_up(in_feats, _LANE)
    fh_p = _round_up(hidden, _LANE)
    fo_p = _round_up(num_classes, _LANE)
    vmem_limit = _vmem_limit_bytes()

    # Single pre-pass over the adjacency: pad + narrow to int8 ({0,1} exact),
    # then derive degrees from the already-narrowed array.
    a_i8 = _pad2(adj, (n_pad, n_pad)).astype(jnp.int8)
    deg = jnp.sum(a_i8, axis=1, dtype=jnp.float32)
    d_col = jnp.where(deg > 0, jax.lax.rsqrt(deg), 0.0)[:, None]  # (n_pad, 1)

    x_p = _pad2(x, (n_pad, fin_p)).astype(jnp.bfloat16)
    w1_p = _pad2(w1, (fin_p, fh_p)).astype(jnp.bfloat16)
    w2_p = _pad2(w2, (fh_p, fo_p)).astype(jnp.bfloat16)
    b1_p = _pad2(b1.reshape(1, -1).astype(jnp.float32), (1, fh_p))
    b2_p = _pad2(b2.reshape(1, -1).astype(jnp.float32), (1, fo_p))

    # Layer-1 projection: p1 = d * (X @ W1)
    p1 = _project(x_p, w1_p, d_col, tm=tm, vmem_limit=vmem_limit)
    # Layer-1 aggregation fused with layer-2 projection:
    #   p2 = d * (relu(d * (A @ p1) + b1) @ W2)      (h1 never hits HBM)
    p2 = _aggregate(a_i8, p1, d_col, b1_p, tm=tm, tk=tk, apply_relu=True,
                    out_dtype=jnp.bfloat16, w2=w2_p, vmem_limit=vmem_limit)
    # Layer-2 aggregation: out = d * (A @ p2) + b2
    out = _aggregate(a_i8, p2, d_col, b2_p, tm=tm, tk=tk, apply_relu=False,
                     out_dtype=jnp.float32, w2=None, vmem_limit=vmem_limit)

    return out[:n, :num_classes]


if __name__ == "__main__":
    N = 16            # nodes
    IN_FEATS = 8
    HIDDEN = 32
    NUM_CLASSES = 4

    key = jax.random.PRNGKey(0)
    k_adj, k_x, k_w1, k_w2 = jax.random.split(key, 4)

    # Random symmetric {0,1} adjacency (no self-loops) plus a ring so every
    # node has nonzero degree and the 'both' normalization is well-defined.
    rand = jax.random.uniform(k_adj, (N, N))
    adj = (rand + rand.T > 1.4).astype(jnp.float32)
    adj = adj * (1.0 - jnp.eye(N, dtype=jnp.float32))
    ring = jnp.roll(jnp.eye(N, dtype=jnp.float32), 1, axis=1)
    adj = jnp.clip(adj + ring + ring.T, 0.0, 1.0)

    x = jax.random.normal(k_x, (N, IN_FEATS), dtype=jnp.float32)
    w1 = jax.random.normal(k_w1, (IN_FEATS, HIDDEN), dtype=jnp.float32) * jnp.sqrt(
        2.0 / (IN_FEATS + HIDDEN))
    b1 = jnp.zeros((1, HIDDEN), dtype=jnp.float32)
    w2 = jax.random.normal(k_w2, (HIDDEN, NUM_CLASSES), dtype=jnp.float32) * jnp.sqrt(
        2.0 / (HIDDEN + NUM_CLASSES))
    b2 = jnp.zeros((1, NUM_CLASSES), dtype=jnp.float32)

    fwd = jax.jit(gcn_forward)
    out = jax.block_until_ready(fwd(adj, x, w1, b1, w2, b2))

    # Reference (plain JAX), mirroring the kernel's bf16 quantization points
    # so the comparison stays tight.
    def q(v):
        return v.astype(jnp.bfloat16).astype(jnp.float32)

    deg = jnp.sum(adj, axis=1)
    dis = jnp.where(deg > 0, 1.0 / jnp.sqrt(deg), 0.0)
    p1_ref = q(dis[:, None] * (q(x) @ q(w1)))
    h1_ref = q(jnp.maximum(dis[:, None] * (adj @ p1_ref) + b1, 0.0))
    p2_ref = q(dis[:, None] * (h1_ref @ q(w2)))
    out_ref = dis[:, None] * (adj @ p2_ref) + b2

    assert out.shape == (N, NUM_CLASSES)
    assert jnp.allclose(out, out_ref, atol=2e-3, rtol=2e-3), float(
        jnp.max(jnp.abs(out - out_ref)))

    print("KERNEL_OK")
</pallas_src>

<mosaic_0001>
module attributes {stable_mosaic.version = 11 : i64} {
  func.func @kernel(%arg0: i32, %arg1: i32, %arg2: memref<128x128xi8, #tpu.memory_space<vmem>>, %arg3: memref<128x128xbf16, #tpu.memory_space<vmem>>, %arg4: memref<128x1xf32, #tpu.memory_space<vmem>>, %arg5: memref<1x128xf32, #tpu.memory_space<vmem>>, %arg6: memref<128x128xbf16, #tpu.memory_space<vmem>>, %arg7: memref<128x128xbf16, #tpu.memory_space<vmem>>, %arg8: memref<128x128xf32, #tpu.memory_space<vmem>>) attributes {dimension_semantics = [#tpu.dimension_semantics<parallel>, #tpu.dimension_semantics<arbitrary>], iteration_bounds = array<i64: 1, 1>, scalar_prefetch = 0 : i64, scratch_operands = 1 : i64, tpu.core_type = #tpu.core_type<tc>, window_params = [{transform_indices = @transform_0, window_bounds = array<i64: 128, 128>}, {pipeline_mode = #tpu.pipeline_mode<synchronous>, transform_indices = @transform_1, window_bounds = array<i64: 128, 128>}, {transform_indices = @transform_2, window_bounds = array<i64: 128, 1>}, {pipeline_mode = #tpu.pipeline_mode<synchronous>, transform_indices = @transform_3, window_bounds = array<i64: 1, 128>}, {pipeline_mode = #tpu.pipeline_mode<synchronous>, transform_indices = @transform_4, window_bounds = array<i64: 128, 128>}, {transform_indices = @transform_5, window_bounds = array<i64: 128, 128>}]} {
    %c0_i32 = arith.constant 0 : i32
    %0 = arith.cmpi eq, %arg1, %c0_i32 : i32
    %1 = arith.extui %0 : i1 to i32
    %c0_i32_0 = arith.constant 0 : i32
    %2 = arith.cmpi ne, %1, %c0_i32_0 : i32
    scf.if %2 {
      %cst_9 = arith.constant 0.000000e+00 : f32
      %16 = vector.broadcast %cst_9 : f32 to vector<128x128xf32>
      %c0_10 = arith.constant 0 : index
      %c0_11 = arith.constant 0 : index
      %17 = vector.load %arg8[%c0_10, %c0_11] : memref<128x128xf32, #tpu.memory_space<vmem>>, vector<128x128xf32>
      tpu.vector_store %arg8[%c0_10, %c0_11], %16 {strides = array<i32>} : memref<128x128xf32, #tpu.memory_space<vmem>>, vector<128x128xf32>,
    } else {
    }
    %c128_i32 = arith.constant 128 : i32
    %3 = arith.muli %arg1, %c128_i32 : i32
    %4 = tpu.assume_multiple %3, 128 : i32
    %5 = arith.index_cast %4 : i32 to index
    %c0 = arith.constant 0 : index
    %6 = vector.load %arg3[%5, %c0] : memref<128x128xbf16, #tpu.memory_space<vmem>>, vector<128x128xbf16>
    %c0_1 = arith.constant 0 : index
    %c0_2 = arith.constant 0 : index
    %7 = vector.load %arg2[%c0_1, %c0_2] : memref<128x128xi8, #tpu.memory_space<vmem>>, vector<128x128xi8>
    %8 = arith.sitofp %7 : vector<128x128xi8> to vector<128x128xbf16>
    %c0_3 = arith.constant 0 : index
    %c0_4 = arith.constant 0 : index
    %9 = vector.load %arg8[%c0_3, %c0_4] : memref<128x128xf32, #tpu.memory_space<vmem>>, vector<128x128xf32>
    %cst = arith.constant dense<0.000000e+00> : vector<128x128xf32>
    %10 = tpu.matmul %8, %6, %cst {dimension_numbers = #tpu.dot_dimension_numbers<[1], [0], [0], [1], [0, 0, 1, 1], [], []>} : vector<128x128xbf16>, vector<128x128xbf16>, vector<128x128xf32> -> vector<128x128xf32>
    %11 = arith.addf %9, %10 : vector<128x128xf32>
    %c0_5 = arith.constant 0 : index
    %c0_6 = arith.constant 0 : index
    %12 = vector.load %arg8[%c0_5, %c0_6] : memref<128x128xf32, #tpu.memory_space<vmem>>, vector<128x128xf32>
    tpu.vector_store %arg8[%c0_5, %c0_6], %11 {strides = array<i32>} : memref<128x128xf32, #tpu.memory_space<vmem>>, vector<128x128xf32>,
    %c0_i32_7 = arith.constant 0 : i32
    %13 = arith.cmpi eq, %arg1, %c0_i32_7 : i32
    %14 = arith.extui %13 : i1 to i32
    %c0_i32_8 = arith.constant 0 : i32
    %15 = arith.cmpi ne, %14, %c0_i32_8 : i32
    scf.if %15 {
      %c0_9 = arith.constant 0 : index
      %c0_10 = arith.constant 0 : index
      %16 = vector.load %arg4[%c0_9, %c0_10] : memref<128x1xf32, #tpu.memory_space<vmem>>, vector<128x1xf32>
      %c0_11 = arith.constant 0 : index
      %c0_12 = arith.constant 0 : index
      %17 = vector.load %arg8[%c0_11, %c0_12] : memref<128x128xf32, #tpu.memory_space<vmem>>, vector<128x128xf32>
      %18 = vector.broadcast %16 : vector<128x1xf32> to vector<128x128xf32>
      %19 = arith.mulf %18, %17 : vector<128x128xf32>
      %c0_13 = arith.constant 0 : index
      %c0_14 = arith.constant 0 : index
      %20 = vector.load %arg5[%c0_13, %c0_14] : memref<1x128xf32, #tpu.memory_space<vmem>>, vector<1x128xf32>
      %21 = vector.broadcast %20 : vector<1x128xf32> to vector<128x128xf32>
      %22 = arith.addf %19, %21 : vector<128x128xf32>
      %cst_15 = arith.constant 0.000000e+00 : f32
      %23 = vector.broadcast %cst_15 : f32 to vector<128x128xf32>
      %24 = arith.maximumf %22, %23 : vector<128x128xf32>
      %c0_16 = arith.constant 0 : index
      %c0_17 = arith.constant 0 : index
      %25 = vector.load %arg4[%c0_16, %c0_17] : memref<128x1xf32, #tpu.memory_space<vmem>>, vector<128x1xf32>
      %26 = arith.truncf %24 : vector<128x128xf32> to vector<128x128xbf16>
      %c0_18 = arith.constant 0 : index
      %c0_19 = arith.constant 0 : index
      %27 = vector.load %arg6[%c0_18, %c0_19] : memref<128x128xbf16, #tpu.memory_space<vmem>>, vector<128x128xbf16>
      %cst_20 = arith.constant dense<0.000000e+00> : vector<128x128xf32>
      %28 = tpu.matmul %26, %27, %cst_20 {dimension_numbers = #tpu.dot_dimension_numbers<[1], [0], [0], [1], [0, 0, 1, 1], [], []>} : vector<128x128xbf16>, vector<128x128xbf16>, vector<128x128xf32> -> vector<128x128xf32>
      %29 = vector.broadcast %25 : vector<128x1xf32> to vector<128x128xf32>
      %30 = arith.mulf %29, %28 : vector<128x128xf32>
      %31 = arith.truncf %30 : vector<128x128xf32> to vector<128x128xbf16>
      %c0_21 = arith.constant 0 : index
      %c0_22 = arith.constant 0 : index
      %32 = vector.load %arg7[%c0_21, %c0_22] : memref<128x128xbf16, #tpu.memory_space<vmem>>, vector<128x128xbf16>
      tpu.vector_store %arg7[%c0_21, %c0_22], %31 {strides = array<i32>} : memref<128x128xbf16, #tpu.memory_space<vmem>>, vector<128x128xbf16>,
    } else {
    }
    return
  }
  func.func @transform_0(%arg0: i32, %arg1: i32) -> (i32, i32) {
    %c0_i32 = arith.constant 0 : i32
    return %arg0, %arg1 : i32, i32
  }
  func.func @transform_1(%arg0: i32, %arg1: i32) -> (i32, i32) {
    %c0_i32 = arith.constant 0 : i32
    %c0_i32_0 = arith.constant 0 : i32
    %c0_i32_1 = arith.constant 0 : i32
    return %c0_i32, %c0_i32_0 : i32, i32
  }
  func.func @transform_2(%arg0: i32, %arg1: i32) -> (i32, i32) {
    %c0_i32 = arith.constant 0 : i32
    %c0_i32_0 = arith.constant 0 : i32
    return %arg0, %c0_i32 : i32, i32
  }
  func.func @transform_3(%arg0: i32, %arg1: i32) -> (i32, i32) {
    %c0_i32 = arith.constant 0 : i32
    %c0_i32_0 = arith.constant 0 : i32
    %c0_i32_1 = arith.constant 0 : i32
    return %c0_i32, %c0_i32_0 : i32, i32
  }
  func.func @transform_4(%arg0: i32, %arg1: i32) -> (i32, i32) {
    %c0_i32 = arith.constant 0 : i32
    %c0_i32_0 = arith.constant 0 : i32
    %c0_i32_1 = arith.constant 0 : i32
    return %c0_i32, %c0_i32_0 : i32, i32
  }
  func.func @transform_5(%arg0: i32, %arg1: i32) -> (i32, i32) {
    %c0_i32 = arith.constant 0 : i32
    %c0_i32_0 = arith.constant 0 : i32
    return %arg0, %c0_i32 : i32, i32
  }
}

module attributes {stable_mosaic.version = 11 : i64} {
  func.func @kernel(%arg0: i32, %arg1: i32, %arg2: memref<128x128xi8, #tpu.memory_space<vmem>>, %arg3: memref<128x128xbf16, #tpu.memory_space<vmem>>, %arg4: memref<128x1xf32, #tpu.memory_space<vmem>>, %arg5: memref<1x128xf32, #tpu.memory_space<vmem>>, %arg6: memref<128x128xf32, #tpu.memory_space<vmem>>, %arg7: memref<128x128xf32, #tpu.memory_space<vmem>>) attributes {dimension_semantics = [#tpu.dimension_semantics<parallel>, #tpu.dimension_semantics<arbitrary>], iteration_bounds = array<i64: 1, 1>, scalar_prefetch = 0 : i64, scratch_operands = 1 : i64, tpu.core_type = #tpu.core_type<tc>, window_params = [{transform_indices = @transform_0, window_bounds = array<i64: 128, 128>}, {pipeline_mode = #tpu.pipeline_mode<synchronous>, transform_indices = @transform_1, window_bounds = array<i64: 128, 128>}, {transform_indices = @transform_2, window_bounds = array<i64: 128, 1>}, {pipeline_mode = #tpu.pipeline_mode<synchronous>, transform_indices = @transform_3, window_bounds = array<i64: 1, 128>}, {transform_indices = @transform_4, window_bounds = array<i64: 128, 128>}]} {
    %c0_i32 = arith.constant 0 : i32
    %0 = arith.cmpi eq, %arg1, %c0_i32 : i32
    %1 = arith.extui %0 : i1 to i32
    %c0_i32_0 = arith.constant 0 : i32
    %2 = arith.cmpi ne, %1, %c0_i32_0 : i32
    scf.if %2 {
      %cst_9 = arith.constant 0.000000e+00 : f32
      %16 = vector.broadcast %cst_9 : f32 to vector<128x128xf32>
      %c0_10 = arith.constant 0 : index
      %c0_11 = arith.constant 0 : index
      %17 = vector.load %arg7[%c0_10, %c0_11] : memref<128x128xf32, #tpu.memory_space<vmem>>, vector<128x128xf32>
      tpu.vector_store %arg7[%c0_10, %c0_11], %16 {strides = array<i32>} : memref<128x128xf32, #tpu.memory_space<vmem>>, vector<128x128xf32>,
    } else {
    }
    %c128_i32 = arith.constant 128 : i32
    %3 = arith.muli %arg1, %c128_i32 : i32
    %4 = tpu.assume_multiple %3, 128 : i32
    %5 = arith.index_cast %4 : i32 to index
    %c0 = arith.constant 0 : index
    %6 = vector.load %arg3[%5, %c0] : memref<128x128xbf16, #tpu.memory_space<vmem>>, vector<128x128xbf16>
    %c0_1 = arith.constant 0 : index
    %c0_2 = arith.constant 0 : index
    %7 = vector.load %arg2[%c0_1, %c0_2] : memref<128x128xi8, #tpu.memory_space<vmem>>, vector<128x128xi8>
    %8 = arith.sitofp %7 : vector<128x128xi8> to vector<128x128xbf16>
    %c0_3 = arith.constant 0 : index
    %c0_4 = arith.constant 0 : index
    %9 = vector.load %arg7[%c0_3, %c0_4] : memref<128x128xf32, #tpu.memory_space<vmem>>, vector<128x128xf32>
    %cst = arith.constant dense<0.000000e+00> : vector<128x128xf32>
    %10 = tpu.matmul %8, %6, %cst {dimension_numbers = #tpu.dot_dimension_numbers<[1], [0], [0], [1], [0, 0, 1, 1], [], []>} : vector<128x128xbf16>, vector<128x128xbf16>, vector<128x128xf32> -> vector<128x128xf32>
    %11 = arith.addf %9, %10 : vector<128x128xf32>
    %c0_5 = arith.constant 0 : index
    %c0_6 = arith.constant 0 : index
    %12 = vector.load %arg7[%c0_5, %c0_6] : memref<128x128xf32, #tpu.memory_space<vmem>>, vector<128x128xf32>
    tpu.vector_store %arg7[%c0_5, %c0_6], %11 {strides = array<i32>} : memref<128x128xf32, #tpu.memory_space<vmem>>, vector<128x128xf32>,
    %c0_i32_7 = arith.constant 0 : i32
    %13 = arith.cmpi eq, %arg1, %c0_i32_7 : i32
    %14 = arith.extui %13 : i1 to i32
    %c0_i32_8 = arith.constant 0 : i32
    %15 = arith.cmpi ne, %14, %c0_i32_8 : i32
    scf.if %15 {
      %c0_9 = arith.constant 0 : index
      %c0_10 = arith.constant 0 : index
      %16 = vector.load %arg4[%c0_9, %c0_10] : memref<128x1xf32, #tpu.memory_space<vmem>>, vector<128x1xf32>
      %c0_11 = arith.constant 0 : index
      %c0_12 = arith.constant 0 : index
      %17 = vector.load %arg7[%c0_11, %c0_12] : memref<128x128xf32, #tpu.memory_space<vmem>>, vector<128x128xf32>
      %18 = vector.broadcast %16 : vector<128x1xf32> to vector<128x128xf32>
      %19 = arith.mulf %18, %17 : vector<128x128xf32>
      %c0_13 = arith.constant 0 : index
      %c0_14 = arith.constant 0 : index
      %20 = vector.load %arg5[%c0_13, %c0_14] : memref<1x128xf32, #tpu.memory_space<vmem>>, vector<1x128xf32>
      %21 = vector.broadcast %20 : vector<1x128xf32> to vector<128x128xf32>
      %22 = arith.addf %19, %21 : vector<128x128xf32>
      %c0_15 = arith.constant 0 : index
      %c0_16 = arith.constant 0 : index
      %23 = vector.load %arg6[%c0_15, %c0_16] : memref<128x128xf32, #tpu.memory_space<vmem>>, vector<128x128xf32>
      tpu.vector_store %arg6[%c0_15, %c0_16], %22 {strides = array<i32>} : memref<128x128xf32, #tpu.memory_space<vmem>>, vector<128x128xf32>,
    } else {
    }
    return
  }
  func.func @transform_0(%arg0: i32, %arg1: i32) -> (i32, i32) {
    %c0_i32 = arith.constant 0 : i32
    return %arg0, %arg1 : i32, i32
  }
  func.func @transform_1(%arg0: i32, %arg1: i32) -> (i32, i32) {
    %c0_i32 = arith.constant 0 : i32
    %c0_i32_0 = arith.constant 0 : i32
    %c0_i32_1 = arith.constant 0 : i32
    return %c0_i32, %c0_i32_0 : i32, i32
  }
  func.func @transform_2(%arg0: i32, %arg1: i32) -> (i32, i32) {
    %c0_i32 = arith.constant 0 : i32
    %c0_i32_0 = arith.constant 0 : i32
    return %arg0, %c0_i32 : i32, i32
  }
  func.func @transform_3(%arg0: i32, %arg1: i32) -> (i32, i32) {
    %c0_i32 = arith.constant 0 : i32
    %c0_i32_0 = arith.constant 0 : i32
    %c0_i32_1 = arith.constant 0 : i32
    return %c0_i32, %c0_i32_0 : i32, i32
  }
  func.func @transform_4(%arg0: i32, %arg1: i32) -> (i32, i32) {
    %c0_i32 = arith.constant 0 : i32
    %c0_i32_0 = arith.constant 0 : i32
    return %arg0, %c0_i32 : i32, i32
  }
}

module attributes {stable_mosaic.version = 11 : i64} {
  func.func @_project_kernel(%arg0: i32, %arg1: memref<128x128xbf16, #tpu.memory_space<vmem>>, %arg2: memref<128x128xbf16, #tpu.memory_space<vmem>>, %arg3: memref<128x1xf32, #tpu.memory_space<vmem>>, %arg4: memref<128x128xbf16, #tpu.memory_space<vmem>>) attributes {dimension_semantics = [#tpu.dimension_semantics<parallel>], iteration_bounds = array<i64: 1>, scalar_prefetch = 0 : i64, scratch_operands = 0 : i64, tpu.core_type = #tpu.core_type<tc>, window_params = [{transform_indices = @transform_0, window_bounds = array<i64: 128, 128>}, {pipeline_mode = #tpu.pipeline_mode<synchronous>, transform_indices = @transform_1, window_bounds = array<i64: 128, 128>}, {transform_indices = @transform_2, window_bounds = array<i64: 128, 1>}, {transform_indices = @transform_3, window_bounds = array<i64: 128, 128>}]} {
    %c0 = arith.constant 0 : index
    %c0_0 = arith.constant 0 : index
    %0 = vector.load %arg1[%c0, %c0_0] : memref<128x128xbf16, #tpu.memory_space<vmem>>, vector<128x128xbf16>
    %c0_1 = arith.constant 0 : index
    %c0_2 = arith.constant 0 : index
    %1 = vector.load %arg2[%c0_1, %c0_2] : memref<128x128xbf16, #tpu.memory_space<vmem>>, vector<128x128xbf16>
    %cst = arith.constant dense<0.000000e+00> : vector<128x128xf32>
    %2 = tpu.matmul %0, %1, %cst {dimension_numbers = #tpu.dot_dimension_numbers<[1], [0], [0], [1], [0, 0, 1, 1], [], []>} : vector<128x128xbf16>, vector<128x128xbf16>, vector<128x128xf32> -> vector<128x128xf32>
    %c0_3 = arith.constant 0 : index
    %c0_4 = arith.constant 0 : index
    %3 = vector.load %arg3[%c0_3, %c0_4] : memref<128x1xf32, #tpu.memory_space<vmem>>, vector<128x1xf32>
    %4 = vector.broadcast %3 : vector<128x1xf32> to vector<128x128xf32>
    %5 = arith.mulf %4, %2 : vector<128x128xf32>
    %6 = arith.truncf %5 : vector<128x128xf32> to vector<128x128xbf16>
    %c0_5 = arith.constant 0 : index
    %c0_6 = arith.constant 0 : index
    %7 = vector.load %arg4[%c0_5, %c0_6] : memref<128x128xbf16, #tpu.memory_space<vmem>>, vector<128x128xbf16>
    tpu.vector_store %arg4[%c0_5, %c0_6], %6 {strides = array<i32>} : memref<128x128xbf16, #tpu.memory_space<vmem>>, vector<128x128xbf16>,
    return
  }
  func.func @transform_0(%arg0: i32) -> (i32, i32) {
    %c0_i32 = arith.constant 0 : i32
    %c0_i32_0 = arith.constant 0 : i32
    return %arg0, %c0_i32 : i32, i32
  }
  func.func @transform_1(%arg0: i32) -> (i32, i32) {
    %c0_i32 = arith.constant 0 : i32
    %c0_i32_0 = arith.constant 0 : i32
    %c0_i32_1 = arith.constant 0 : i32
    return %c0_i32, %c0_i32_0 : i32, i32
  }
  func.func @transform_2(%arg0: i32) -> (i32, i32) {
    %c0_i32 = arith.constant 0 : i32
    %c0_i32_0 = arith.constant 0 : i32
    return %arg0, %c0_i32 : i32, i32
  }
  func.func @transform_3(%arg0: i32) -> (i32, i32) {
    %c0_i32 = arith.constant 0 : i32
    %c0_i32_0 = arith.constant 0 : i32
    return %arg0, %c0_i32 : i32, i32
  }
}

</mosaic_0001>

<llo_original>
// kernel: gcn_forward.5
$region0: #{gcn_forward.5}
  #allocation0 [shape = 'u32[]', space=smem, size = 0x4, offset = 0x4, fixed_abs, tag = 'smem constant byte address 0x4 - core index']
  #allocation1 [shape = 'u32[144,128]{1,0:T(1,128)}', space=vmem, size = 0x12000, scoped, tag = 'internal scratch']
  #allocation2 [shape = 'f32[128,128]{1,0:T(8,128)}', space=vmem, size = 0x10000, scoped, tag = 'scratch operand']
  %s0 = inlined_call_operand.vmem [shape: s8[128,128], index: 0, kind: input, shape index: {}]
  %s1 = inlined_call_operand.vmem [shape: bf16[128,128], index: 1, kind: input, shape index: {}]
  %s2 = inlined_call_operand.vmem [shape: f32[128,1], index: 2, kind: input, shape index: {}]
  %s3 = inlined_call_operand.vmem [shape: f32[1,128], index: 3, kind: input, shape index: {}]
  %s4 = inlined_call_operand.vmem [shape: f32[128,128], index: 4, kind: output, shape index: {}]
  %s5 = sld [smem:[#allocation0]]
  $region34: #{gcn_forward.5} parent=0
    _
  %s7 = ssub.s32 1, %s5
  %s8 = scalar_select 0, %s7, %s5
  // Predicated region
  $region2: #{gcn_forward.5} parent=0 // pred_check
    _
  $region3: #{gcn_forward.5} parent=0 // pred_check_branch
    %10 = sbr.rel (0) target = $region5
  $region4: #{gcn_forward.5} parent=0 // pred_region
    _
  $region5: #{gcn_forward.5} parent=0 // pred_fallthru
    _
  // Predicated region
  $region6: #{gcn_forward.5} parent=0 // pred_check
    _
  $region7: #{gcn_forward.5} parent=0 // pred_check_branch
    %12 = sbr.rel (0) target = $region9
  $region8: #{gcn_forward.5} parent=0 // pred_region
    _
  $region9: #{gcn_forward.5} parent=0 // pred_fallthru
    _
  // Predicated region
  $region10: #{gcn_forward.5} parent=0 // pred_check
    _
  $region11: #{gcn_forward.5} parent=0 // pred_check_branch
    %14 = sbr.rel (0) target = $region13
  $region12: #{gcn_forward.5} parent=0 // pred_region
    _
  $region13: #{gcn_forward.5} parent=0 // pred_fallthru
    _
  // Predicated region
  $region14: #{gcn_forward.5} parent=0 // pred_check
    _
  $region15: #{gcn_forward.5} parent=0 // pred_check_branch
    %16 = sbr.rel (0) target = $region17
  $region16: #{gcn_forward.5} parent=0 // pred_region
    _
  $region17: #{gcn_forward.5} parent=0 // pred_fallthru
    _
  %p18 = scmp.eq.s32.totalorder 0, 0
  // Predicated region
  $region18: #{gcn_forward.5} parent=0 // pred_check
    %p19 = pneg %p18
  $region19: #{gcn_forward.5} parent=0 // pred_check_branch
    %21 = sbr.rel (%p19) target = $region21
  $region20: #{gcn_forward.5} parent=0 // pred_region
    %22 = vst [vmem:[#allocation2] sm:$0xff] 0.0
    %23 = vst [vmem:[#allocation2 + $0x8] sm:$0xff] 0.0
    %24 = vst [vmem:[#allocation2 + $0x10] sm:$0xff] 0.0
    %25 = vst [vmem:[#allocation2 + $0x18] sm:$0xff] 0.0
    %26 = vst [vmem:[#allocation2 + $0x20] sm:$0xff] 0.0
    %27 = vst [vmem:[#allocation2 + $0x28] sm:$0xff] 0.0
    %28 = vst [vmem:[#allocation2 + $0x30] sm:$0xff] 0.0
    %29 = vst [vmem:[#allocation2 + $0x38] sm:$0xff] 0.0
    %30 = vst [vmem:[#allocation2 + $0x40] sm:$0xff] 0.0
    %31 = vst [vmem:[#allocation2 + $0x48] sm:$0xff] 0.0
    %32 = vst [vmem:[#allocation2 + $0x50] sm:$0xff] 0.0
    %33 = vst [vmem:[#allocation2 + $0x58] sm:$0xff] 0.0
    %34 = vst [vmem:[#allocation2 + $0x60] sm:$0xff] 0.0
    %35 = vst [vmem:[#allocation2 + $0x68] sm:$0xff] 0.0
    %36 = vst [vmem:[#allocation2 + $0x70] sm:$0xff] 0.0
    %37 = vst [vmem:[#allocation2 + $0x78] sm:$0xff] 0.0
  $region21: #{gcn_forward.5} parent=0 // pred_fallthru
    _
  %s38 = smul.u32 0, 128
  %s39 = sshra.s32 %s38, 3
  %s40 = sand.u32 %s38, 7
  %s41 = smul.addr %s39, 4
  %s42 = scalar_lea.vmem %s1, %s41
  %v43 = vld [vmem:[%s42] sm:$0xf]
  %v44 = vld [vmem:[%s42 + $0x4] sm:$0xf]
  %v45 = vld [vmem:[%s42 + $0x8] sm:$0xf]
  %v46 = vld [vmem:[%s42 + $0xc] sm:$0xf]
  %v47 = vld [vmem:[%s42 + $0x10] sm:$0xf]
  %v48 = vld [vmem:[%s42 + $0x14] sm:$0xf]
  %v49 = vld [vmem:[%s42 + $0x18] sm:$0xf]
  %v50 = vld [vmem:[%s42 + $0x1c] sm:$0xf]
  %v51 = vld [vmem:[%s42 + $0x20] sm:$0xf]
  %v52 = vld [vmem:[%s42 + $0x24] sm:$0xf]
  %v53 = vld [vmem:[%s42 + $0x28] sm:$0xf]
  %v54 = vld [vmem:[%s42 + $0x2c] sm:$0xf]
  %v55 = vld [vmem:[%s42 + $0x30] sm:$0xf]
  %v56 = vld [vmem:[%s42 + $0x34] sm:$0xf]
  %v57 = vld [vmem:[%s42 + $0x38] sm:$0xf]
  %v58 = vld [vmem:[%s42 + $0x3c] sm:$0xf]
  %v59 = vld [vmem:[%s0] sm:$0xff]
  %v60 = vld [vmem:[%s0 + $0x8] sm:$0xff]
  %v61 = vld [vmem:[%s0 + $0x10] sm:$0xff]
  %v62 = vld [vmem:[%s0 + $0x18] sm:$0xff]
  %v63 = vunpack.c.l.s8.bf16 %v59
  %v64 = vunpack.c.h.s8.bf16 %v59
  %v65 = vunpack.c.l.s8.bf16 %v60
  %v66 = vunpack.c.h.s8.bf16 %v60
  %v67 = vunpack.c.l.s8.bf16 %v61
  %v68 = vunpack.c.h.s8.bf16 %v61
  %v69 = vunpack.c.l.s8.bf16 %v62
  %v70 = vunpack.c.h.s8.bf16 %v62
  %v71 = vld [vmem:[#allocation2] sm:$0xff]
  %v72 = vld [vmem:[#allocation2 + $0x8] sm:$0xff]
  %v73 = vld [vmem:[#allocation2 + $0x10] sm:$0xff]
  %v74 = vld [vmem:[#allocation2 + $0x18] sm:$0xff]
  %v75 = vld [vmem:[#allocation2 + $0x20] sm:$0xff]
  %v76 = vld [vmem:[#allocation2 + $0x28] sm:$0xff]
  %v77 = vld [vmem:[#allocation2 + $0x30] sm:$0xff]
  %v78 = vld [vmem:[#allocation2 + $0x38] sm:$0xff]
  %v79 = vld [vmem:[#allocation2 + $0x40] sm:$0xff]
  %v80 = vld [vmem:[#allocation2 + $0x48] sm:$0xff]
  %v81 = vld [vmem:[#allocation2 + $0x50] sm:$0xff]
  %v82 = vld [vmem:[#allocation2 + $0x58] sm:$0xff]
  %v83 = vld [vmem:[#allocation2 + $0x60] sm:$0xff]
  %v84 = vld [vmem:[#allocation2 + $0x68] sm:$0xff]
  %v85 = vld [vmem:[#allocation2 + $0x70] sm:$0xff]
  %v86 = vld [vmem:[#allocation2 + $0x78] sm:$0xff]
  %v103 = vunpack.c.l.b16 %v43
  %v104 = vunpack.c.l.b16 %v44
  %v105 = vunpack.c.l.b16 %v45
  %v106 = vunpack.c.l.b16 %v46
  %v107 = vunpack.c.l.b16 %v47
  %v108 = vunpack.c.l.b16 %v48
  %v109 = vunpack.c.l.b16 %v49
  %v110 = vunpack.c.l.b16 %v50
  %v111 = vunpack.c.l.b16 %v51
  %v112 = vunpack.c.l.b16 %v52
  %v113 = vunpack.c.l.b16 %v53
  %v114 = vunpack.c.l.b16 %v54
  %v115 = vunpack.c.l.b16 %v55
  %v116 = vunpack.c.l.b16 %v56
  %v117 = vunpack.c.l.b16 %v57
  %v118 = vunpack.c.l.b16 %v58
  %v119 = vpack.c.b16 %v104, %v103
  %v120 = vpack.c.b16 %v106, %v105
  %v121 = vpack.c.b16 %v108, %v107
  %v122 = vpack.c.b16 %v110, %v109
  %v123 = vpack.c.b16 %v112, %v111
  %v124 = vpack.c.b16 %v114, %v113
  %v125 = vpack.c.b16 %v116, %v115
  %v126 = vpack.c.b16 %v118, %v117
  %135 = vmatprep.subr.bf16.mxu0 0
  %136 = vmatpush1.bf16.msra.mxu0 %v119
  %137 = vmatprep.subr.bf16.mxu0 0
  %138 = vmatpush1.bf16.msra.mxu0 %v120
  %139 = vmatprep.subr.bf16.mxu0 0
  %140 = vmatpush1.bf16.msra.mxu0 %v121
  %141 = vmatprep.subr.bf16.mxu0 0
  %142 = vmatpush1.bf16.msra.mxu0 %v122
  %143 = vmatprep.subr.bf16.mxu0 0
  %144 = vmatpush1.bf16.msra.mxu0 %v123
  %145 = vmatprep.subr.bf16.mxu0 0
  %146 = vmatpush1.bf16.msra.mxu0 %v124
  %147 = vmatprep.subr.bf16.mxu0 0
  %148 = vmatpush1.bf16.msra.mxu0 %v125
  %149 = vmatprep.subr.bf16.mxu0 0
  %150 = vmatpush1.bf16.msra.mxu0 %v126
  %151 = vmatprep.subr.bf16.mxu0 0
  %152 = vmatpush1.bf16.msra.mxu0 0
  %153 = vmatprep.subr.bf16.mxu0 0
  %154 = vmatpush1.bf16.msra.mxu0 0
  %155 = vmatprep.subr.bf16.mxu0 0
  %156 = vmatpush1.bf16.msra.mxu0 0
  %157 = vmatprep.subr.bf16.mxu0 0
  %158 = vmatpush1.bf16.msra.mxu0 0
  %159 = vmatprep.subr.bf16.mxu0 0
  %160 = vmatpush1.bf16.msra.mxu0 0
  %161 = vmatprep.subr.bf16.mxu0 0
  %162 = vmatpush1.bf16.msra.mxu0 0
  %163 = vmatprep.subr.bf16.mxu0 0
  %164 = vmatpush1.bf16.msra.mxu0 0
  %165 = vmatprep.subr.bf16.mxu0 0
  %166 = vmatpush1.bf16.msra.mxu0 0
  %167 = vmatprep.mubr.bf16.mxu0 0
  %168 = vmatmul.mubr.bf16.gmra.mrb[0].mxu0 %v63
  %v169 = vpop.f32.mrb[0].mxu0
  %v170 = vadd.f32 0.0, %v169
  %v171 = vpop.f32.mrb[0].mxu0
  %v172 = vpop.f32.mrb[0].mxu0
  %v173 = vadd.f32 0.0, %v172
  %v174 = vpop.f32.mrb[0].mxu0
  %175 = vmatprep.mubr.bf16.mxu0 0
  %176 = vmatmul.mubr.bf16.gmra.mrb[0].mxu0 %v64
  %v177 = vpop.f32.mrb[0].mxu0
  %v178 = vadd.f32 0.0, %v177
  %v179 = vpop.f32.mrb[0].mxu0
  %v180 = vpop.f32.mrb[0].mxu0
  %v181 = vadd.f32 0.0, %v180
  %v182 = vpop.f32.mrb[0].mxu0
  %183 = vmatprep.mubr.bf16.mxu0 0
  %184 = vmatmul.mubr.bf16.gmra.mrb[0].mxu0 %v65
  %v185 = vpop.f32.mrb[0].mxu0
  %v186 = vadd.f32 0.0, %v185
  %v187 = vpop.f32.mrb[0].mxu0
  %v188 = vpop.f32.mrb[0].mxu0
  %v189 = vadd.f32 0.0, %v188
  %v190 = vpop.f32.mrb[0].mxu0
  %191 = vmatprep.mubr.bf16.mxu0 0
  %192 = vmatmul.mubr.bf16.gmra.mrb[0].mxu0 %v66
  %v193 = vpop.f32.mrb[0].mxu0
  %v194 = vadd.f32 0.0, %v193
  %v195 = vpop.f32.mrb[0].mxu0
  %v196 = vpop.f32.mrb[0].mxu0
  %v197 = vadd.f32 0.0, %v196
  %v198 = vpop.f32.mrb[0].mxu0
  %199 = vmatprep.mubr.bf16.mxu0 0
  %200 = vmatmul.mubr.bf16.gmra.mrb[0].mxu0 %v67
  %v201 = vpop.f32.mrb[0].mxu0
  %v202 = vadd.f32 0.0, %v201
  %v203 = vpop.f32.mrb[0].mxu0
  %v204 = vpop.f32.mrb[0].mxu0
  %v205 = vadd.f32 0.0, %v204
  %v206 = vpop.f32.mrb[0].mxu0
  %207 = vmatprep.mubr.bf16.mxu0 0
  %208 = vmatmul.mubr.bf16.gmra.mrb[0].mxu0 %v68
  %v209 = vpop.f32.mrb[0].mxu0
  %v210 = vadd.f32 0.0, %v209
  %v211 = vpop.f32.mrb[0].mxu0
  %v212 = vpop.f32.mrb[0].mxu0
  %v213 = vadd.f32 0.0, %v212
  %v214 = vpop.f32.mrb[0].mxu0
  %215 = vmatprep.mubr.bf16.mxu0 0
  %216 = vmatmul.mubr.bf16.gmra.mrb[0].mxu0 %v69
  %v217 = vpop.f32.mrb[0].mxu0
  %v218 = vadd.f32 0.0, %v217
  %v219 = vpop.f32.mrb[0].mxu0
  %v220 = vpop.f32.mrb[0].mxu0
  %v221 = vadd.f32 0.0, %v220
  %v222 = vpop.f32.mrb[0].mxu0
  %223 = vmatprep.mubr.bf16.mxu0 0
  %224 = vmatmul.mubr.bf16.gmra.mrb[0].mxu0 %v70
  %v225 = vpop.f32.mrb[0].mxu0
  %v226 = vadd.f32 0.0, %v225
  %v227 = vpop.f32.mrb[0].mxu0
  %v228 = vpop.f32.mrb[0].mxu0
  %v229 = vadd.f32 0.0, %v228
  %v230 = vpop.f32.mrb[0].mxu0
  %231 = vdwg.mxu0
  %v232 = vadd.f32 %v71, %v170
  %v233 = vadd.f32 %v72, %v173
  %v234 = vadd.f32 %v73, %v178
  %v235 = vadd.f32 %v74, %v181
  %v236 = vadd.f32 %v75, %v186
  %v237 = vadd.f32 %v76, %v189
  %v238 = vadd.f32 %v77, %v194
  %v239 = vadd.f32 %v78, %v197
  %v240 = vadd.f32 %v79, %v202
  %v241 = vadd.f32 %v80, %v205
  %v242 = vadd.f32 %v81, %v210
  %v243 = vadd.f32 %v82, %v213
  %v244 = vadd.f32 %v83, %v218
  %v245 = vadd.f32 %v84, %v221
  %v246 = vadd.f32 %v85, %v226
  %v247 = vadd.f32 %v86, %v229
  %248 = vst [vmem:[#allocation2] sm:$0xff] %v232
  %249 = vst [vmem:[#allocation2 + $0x8] sm:$0xff] %v233
  %250 = vst [vmem:[#allocation2 + $0x10] sm:$0xff] %v234
  %251 = vst [vmem:[#allocation2 + $0x18] sm:$0xff] %v235
  %252 = vst [vmem:[#allocation2 + $0x20] sm:$0xff] %v236
  %253 = vst [vmem:[#allocation2 + $0x28] sm:$0xff] %v237
  %254 = vst [vmem:[#allocation2 + $0x30] sm:$0xff] %v238
  %255 = vst [vmem:[#allocation2 + $0x38] sm:$0xff] %v239
  %256 = vst [vmem:[#allocation2 + $0x40] sm:$0xff] %v240
  %257 = vst [vmem:[#allocation2 + $0x48] sm:$0xff] %v241
  %258 = vst [vmem:[#allocation2 + $0x50] sm:$0xff] %v242
  %259 = vst [vmem:[#allocation2 + $0x58] sm:$0xff] %v243
  %260 = vst [vmem:[#allocation2 + $0x60] sm:$0xff] %v244
  %261 = vst [vmem:[#allocation2 + $0x68] sm:$0xff] %v245
  %262 = vst [vmem:[#allocation2 + $0x70] sm:$0xff] %v246
  %263 = vst [vmem:[#allocation2 + $0x78] sm:$0xff] %v247
  // Predicated region
  $region22: #{gcn_forward.5} parent=0 // pred_check
    %p264 = pneg %p18
  $region23: #{gcn_forward.5} parent=0 // pred_check_branch
    %266 = sbr.rel (%p264) target = $region25
  $region24: #{gcn_forward.5} parent=0 // pred_region
    %v267 = vld [vmem:[%s2] sm:$0xff]
    %v268 = vld [vmem:[%s2 + $0x8] sm:$0xff]
    %v269 = vld [vmem:[%s2 + $0x10] sm:$0xff]
    %v270 = vld [vmem:[%s2 + $0x18] sm:$0xff]
    %v271 = vld [vmem:[%s2 + $0x20] sm:$0xff]
    %v272 = vld [vmem:[%s2 + $0x28] sm:$0xff]
    %v273 = vld [vmem:[%s2 + $0x30] sm:$0xff]
    %v274 = vld [vmem:[%s2 + $0x38] sm:$0xff]
    %v275 = vld [vmem:[%s2 + $0x40] sm:$0xff]
    %v276 = vld [vmem:[%s2 + $0x48] sm:$0xff]
    %v277 = vld [vmem:[%s2 + $0x50] sm:$0xff]
    %v278 = vld [vmem:[%s2 + $0x58] sm:$0xff]
    %v279 = vld [vmem:[%s2 + $0x60] sm:$0xff]
    %v280 = vld [vmem:[%s2 + $0x68] sm:$0xff]
    %v281 = vld [vmem:[%s2 + $0x70] sm:$0xff]
    %v282 = vld [vmem:[%s2 + $0x78] sm:$0xff]
    %v283 = vld [vmem:[#allocation2] sm:$0xff]
    %v284 = vld [vmem:[#allocation2 + $0x8] sm:$0xff]
    %v285 = vld [vmem:[#allocation2 + $0x10] sm:$0xff]
    %v286 = vld [vmem:[#allocation2 + $0x18] sm:$0xff]
    %v287 = vld [vmem:[#allocation2 + $0x20] sm:$0xff]
    %v288 = vld [vmem:[#allocation2 + $0x28] sm:$0xff]
    %v289 = vld [vmem:[#allocation2 + $0x30] sm:$0xff]
    %v290 = vld [vmem:[#allocation2 + $0x38] sm:$0xff]
    %v291 = vld [vmem:[#allocation2 + $0x40] sm:$0xff]
    %v292 = vld [vmem:[#allocation2 + $0x48] sm:$0xff]
    %v293 = vld [vmem:[#allocation2 + $0x50] sm:$0xff]
    %v294 = vld [vmem:[#allocation2 + $0x58] sm:$0xff]
    %v295 = vld [vmem:[#allocation2 + $0x60] sm:$0xff]
    %v296 = vld [vmem:[#allocation2 + $0x68] sm:$0xff]
    %v297 = vld [vmem:[#allocation2 + $0x70] sm:$0xff]
    %v298 = vld [vmem:[#allocation2 + $0x78] sm:$0xff]
    %300 = vset.pattern.permute.xlu0 0
    %301 = vperm.xlu0 %300, %v267
    %v302 = vpop.permute.xlu0 %301
    %305 = vset.pattern.permute.xlu0 0
    %306 = vperm.xlu0 %305, %v268
    %v307 = vpop.permute.xlu0 %306
    %310 = vset.pattern.permute.xlu0 0
    %311 = vperm.xlu0 %310, %v269
    %v312 = vpop.permute.xlu0 %311
    %315 = vset.pattern.permute.xlu0 0
    %316 = vperm.xlu0 %315, %v270
    %v317 = vpop.permute.xlu0 %316
    %320 = vset.pattern.permute.xlu0 0
    %321 = vperm.xlu0 %320, %v271
    %v322 = vpop.permute.xlu0 %321
    %325 = vset.pattern.permute.xlu0 0
    %326 = vperm.xlu0 %325, %v272
    %v327 = vpop.permute.xlu0 %326
    %330 = vset.pattern.permute.xlu0 0
    %331 = vperm.xlu0 %330, %v273
    %v332 = vpop.permute.xlu0 %331
    %335 = vset.pattern.permute.xlu0 0
    %336 = vperm.xlu0 %335, %v274
    %v337 = vpop.permute.xlu0 %336
    %340 = vset.pattern.permute.xlu0 0
    %341 = vperm.xlu0 %340, %v275
    %v342 = vpop.permute.xlu0 %341
    %345 = vset.pattern.permute.xlu0 0
    %346 = vperm.xlu0 %345, %v276
    %v347 = vpop.permute.xlu0 %346
    %350 = vset.pattern.permute.xlu0 0
    %351 = vperm.xlu0 %350, %v277
    %v352 = vpop.permute.xlu0 %351
    %355 = vset.pattern.permute.xlu0 0
    %356 = vperm.xlu0 %355, %v278
    %v357 = vpop.permute.xlu0 %356
    %360 = vset.pattern.permute.xlu0 0
    %361 = vperm.xlu0 %360, %v279
    %v362 = vpop.permute.xlu0 %361
    %365 = vset.pattern.permute.xlu0 0
    %366 = vperm.xlu0 %365, %v280
    %v367 = vpop.permute.xlu0 %366
    %370 = vset.pattern.permute.xlu0 0
    %371 = vperm.xlu0 %370, %v281
    %v372 = vpop.permute.xlu0 %371
    %375 = vset.pattern.permute.xlu0 0
    %376 = vperm.xlu0 %375, %v282
    %v377 = vpop.permute.xlu0 %376
    %v379 = vmul.f32 %v302, %v283
    %v380 = vmul.f32 %v307, %v284
    %v381 = vmul.f32 %v312, %v285
    %v382 = vmul.f32 %v317, %v286
    %v383 = vmul.f32 %v322, %v287
    %v384 = vmul.f32 %v327, %v288
    %v385 = vmul.f32 %v332, %v289
    %v386 = vmul.f32 %v337, %v290
    %v387 = vmul.f32 %v342, %v291
    %v388 = vmul.f32 %v347, %v292
    %v389 = vmul.f32 %v352, %v293
    %v390 = vmul.f32 %v357, %v294
    %v391 = vmul.f32 %v362, %v295
    %v392 = vmul.f32 %v367, %v296
    %v393 = vmul.f32 %v372, %v297
    %v394 = vmul.f32 %v377, %v298
    %v395 = vld [vmem:[%s3] sm:$0x1]
    %v397 = vlaneseq
    %v398 = vshrl.u32 %v397, 7
    %v399 = vsub.s32 0, %v398
    %v400 = vrot.slane %v395, %v399
    %v402 = vadd.f32 %v379, %v400
    %v403 = vadd.f32 %v380, %v400
    %v404 = vadd.f32 %v381, %v400
    %v405 = vadd.f32 %v382, %v400
    %v406 = vadd.f32 %v383, %v400
    %v407 = vadd.f32 %v384, %v400
    %v408 = vadd.f32 %v385, %v400
    %v409 = vadd.f32 %v386, %v400
    %v410 = vadd.f32 %v387, %v400
    %v411 = vadd.f32 %v388, %v400
    %v412 = vadd.f32 %v389, %v400
    %v413 = vadd.f32 %v390, %v400
    %v414 = vadd.f32 %v391, %v400
    %v415 = vadd.f32 %v392, %v400
    %v416 = vadd.f32 %v393, %v400
    %v417 = vadd.f32 %v394, %v400
    %418 = vst [vmem:[%s4] sm:$0xff] %v402
    %419 = vst [vmem:[%s4 + $0x8] sm:$0xff] %v403
    %420 = vst [vmem:[%s4 + $0x10] sm:$0xff] %v404
    %421 = vst [vmem:[%s4 + $0x18] sm:$0xff] %v405
    %422 = vst [vmem:[%s4 + $0x20] sm:$0xff] %v406
    %423 = vst [vmem:[%s4 + $0x28] sm:$0xff] %v407
    %424 = vst [vmem:[%s4 + $0x30] sm:$0xff] %v408
    %425 = vst [vmem:[%s4 + $0x38] sm:$0xff] %v409
    %426 = vst [vmem:[%s4 + $0x40] sm:$0xff] %v410
    %427 = vst [vmem:[%s4 + $0x48] sm:$0xff] %v411
    %428 = vst [vmem:[%s4 + $0x50] sm:$0xff] %v412
    %429 = vst [vmem:[%s4 + $0x58] sm:$0xff] %v413
    %430 = vst [vmem:[%s4 + $0x60] sm:$0xff] %v414
    %431 = vst [vmem:[%s4 + $0x68] sm:$0xff] %v415
    %432 = vst [vmem:[%s4 + $0x70] sm:$0xff] %v416
    %433 = vst [vmem:[%s4 + $0x78] sm:$0xff] %v417
  $region25: #{gcn_forward.5} parent=0 // pred_fallthru
    _
  // Predicated region
  $region26: #{gcn_forward.5} parent=0 // pred_check
    _
  $region27: #{gcn_forward.5} parent=0 // pred_check_branch
    %435 = sbr.rel (0) target = $region29
  $region28: #{gcn_forward.5} parent=0 // pred_region
    _
  $region29: #{gcn_forward.5} parent=0 // pred_fallthru
    _
  // Predicated region
  $region30: #{gcn_forward.5} parent=0 // pred_check
    _
  $region31: #{gcn_forward.5} parent=0 // pred_check_branch
    %437 = sbr.rel (0) target = $region33
  $region32: #{gcn_forward.5} parent=0 // pred_region
    _
  $region33: #{gcn_forward.5} parent=0 // pred_fallthru
    _

// kernel: gcn_forward.3
$region0: #{gcn_forward.3}
  #allocation0 [shape = 'u32[]', space=smem, size = 0x4, offset = 0x4, fixed_abs, tag = 'smem constant byte address 0x4 - core index']
  #allocation1 [shape = 'u32[144,128]{1,0:T(1,128)}', space=vmem, size = 0x12000, scoped, tag = 'internal scratch']
  %s0 = inlined_call_operand.vmem [shape: bf16[128,128], index: 0, kind: input, shape index: {}]
  %s1 = inlined_call_operand.vmem [shape: bf16[128,128], index: 1, kind: input, shape index: {}]
  %s2 = inlined_call_operand.vmem [shape: f32[128,1], index: 2, kind: input, shape index: {}]
  %s3 = inlined_call_operand.vmem [shape: bf16[128,128], index: 3, kind: output, shape index: {}]
  %s4 = sld [smem:[#allocation0]]
  $region22: #{gcn_forward.3} parent=0
    _
  %s6 = ssub.s32 1, %s4
  %s7 = scalar_select 0, %s6, %s4
  // Predicated region
  $region2: #{gcn_forward.3} parent=0 // pred_check
    _
  $region3: #{gcn_forward.3} parent=0 // pred_check_branch
    %9 = sbr.rel (0) target = $region5
  $region4: #{gcn_forward.3} parent=0 // pred_region
    _
  $region5: #{gcn_forward.3} parent=0 // pred_fallthru
    _
  // Predicated region
  $region6: #{gcn_forward.3} parent=0 // pred_check
    _
  $region7: #{gcn_forward.3} parent=0 // pred_check_branch
    %11 = sbr.rel (0) target = $region9
  $region8: #{gcn_forward.3} parent=0 // pred_region
    _
  $region9: #{gcn_forward.3} parent=0 // pred_fallthru
    _
  // Predicated region
  $region10: #{gcn_forward.3} parent=0 // pred_check
    _
  $region11: #{gcn_forward.3} parent=0 // pred_check_branch
    %13 = sbr.rel (0) target = $region13
  $region12: #{gcn_forward.3} parent=0 // pred_region
    _
  $region13: #{gcn_forward.3} parent=0 // pred_fallthru
    _
  %v15 = vld [vmem:[%s0] sm:$0xf]
  %v16 = vld [vmem:[%s0 + $0x4] sm:$0xf]
  %v17 = vld [vmem:[%s0 + $0x8] sm:$0xf]
  %v18 = vld [vmem:[%s0 + $0xc] sm:$0xf]
  %v19 = vld [vmem:[%s0 + $0x10] sm:$0xf]
  %v20 = vld [vmem:[%s0 + $0x14] sm:$0xf]
  %v21 = vld [vmem:[%s0 + $0x18] sm:$0xf]
  %v22 = vld [vmem:[%s0 + $0x1c] sm:$0xf]
  %v23 = vld [vmem:[%s0 + $0x20] sm:$0xf]
  %v24 = vld [vmem:[%s0 + $0x24] sm:$0xf]
  %v25 = vld [vmem:[%s0 + $0x28] sm:$0xf]
  %v26 = vld [vmem:[%s0 + $0x2c] sm:$0xf]
  %v27 = vld [vmem:[%s0 + $0x30] sm:$0xf]
  %v28 = vld [vmem:[%s0 + $0x34] sm:$0xf]
  %v29 = vld [vmem:[%s0 + $0x38] sm:$0xf]
  %v30 = vld [vmem:[%s0 + $0x3c] sm:$0xf]
  %v31 = vld [vmem:[%s1] sm:$0xf]
  %v32 = vld [vmem:[%s1 + $0x4] sm:$0xf]
  %v33 = vld [vmem:[%s1 + $0x8] sm:$0xf]
  %v34 = vld [vmem:[%s1 + $0xc] sm:$0xf]
  %v35 = vld [vmem:[%s1 + $0x10] sm:$0xf]
  %v36 = vld [vmem:[%s1 + $0x14] sm:$0xf]
  %v37 = vld [vmem:[%s1 + $0x18] sm:$0xf]
  %v38 = vld [vmem:[%s1 + $0x1c] sm:$0xf]
  %v39 = vld [vmem:[%s1 + $0x20] sm:$0xf]
  %v40 = vld [vmem:[%s1 + $0x24] sm:$0xf]
  %v41 = vld [vmem:[%s1 + $0x28] sm:$0xf]
  %v42 = vld [vmem:[%s1 + $0x2c] sm:$0xf]
  %v43 = vld [vmem:[%s1 + $0x30] sm:$0xf]
  %v44 = vld [vmem:[%s1 + $0x34] sm:$0xf]
  %v45 = vld [vmem:[%s1 + $0x38] sm:$0xf]
  %v46 = vld [vmem:[%s1 + $0x3c] sm:$0xf]
  %v63 = vunpack.c.l.b16 %v15
  %v64 = vunpack.c.l.b16 %v16
  %v65 = vunpack.c.l.b16 %v17
  %v66 = vunpack.c.l.b16 %v18
  %v67 = vunpack.c.l.b16 %v19
  %v68 = vunpack.c.l.b16 %v20
  %v69 = vunpack.c.l.b16 %v21
  %v70 = vunpack.c.l.b16 %v22
  %v71 = vunpack.c.l.b16 %v23
  %v72 = vunpack.c.l.b16 %v24
  %v73 = vunpack.c.l.b16 %v25
  %v74 = vunpack.c.l.b16 %v26
  %v75 = vunpack.c.l.b16 %v27
  %v76 = vunpack.c.l.b16 %v28
  %v77 = vunpack.c.l.b16 %v29
  %v78 = vunpack.c.l.b16 %v30
  %v79 = vpack.c.b16 %v64, %v63
  %v80 = vpack.c.b16 %v66, %v65
  %v81 = vpack.c.b16 %v68, %v67
  %v82 = vpack.c.b16 %v70, %v69
  %v83 = vpack.c.b16 %v72, %v71
  %v84 = vpack.c.b16 %v74, %v73
  %v85 = vpack.c.b16 %v76, %v75
  %v86 = vpack.c.b16 %v78, %v77
  %v111 = vunpack.c.l.b16 %v31
  %v112 = vunpack.c.l.b16 %v32
  %v113 = vunpack.c.l.b16 %v33
  %v114 = vunpack.c.l.b16 %v34
  %v115 = vunpack.c.l.b16 %v35
  %v116 = vunpack.c.l.b16 %v36
  %v117 = vunpack.c.l.b16 %v37
  %v118 = vunpack.c.l.b16 %v38
  %v119 = vunpack.c.l.b16 %v39
  %v120 = vunpack.c.l.b16 %v40
  %v121 = vunpack.c.l.b16 %v41
  %v122 = vunpack.c.l.b16 %v42
  %v123 = vunpack.c.l.b16 %v43
  %v124 = vunpack.c.l.b16 %v44
  %v125 = vunpack.c.l.b16 %v45
  %v126 = vunpack.c.l.b16 %v46
  %v127 = vpack.c.b16 %v112, %v111
  %v128 = vpack.c.b16 %v114, %v113
  %v129 = vpack.c.b16 %v116, %v115
  %v130 = vpack.c.b16 %v118, %v117
  %v131 = vpack.c.b16 %v120, %v119
  %v132 = vpack.c.b16 %v122, %v121
  %v133 = vpack.c.b16 %v124, %v123
  %v134 = vpack.c.b16 %v126, %v125
  %143 = vmatprep.subr.bf16.mxu0 0
  %144 = vmatpush1.bf16.msra.mxu0 %v127
  %145 = vmatprep.subr.bf16.mxu0 0
  %146 = vmatpush1.bf16.msra.mxu0 %v128
  %147 = vmatprep.subr.bf16.mxu0 0
  %148 = vmatpush1.bf16.msra.mxu0 %v129
  %149 = vmatprep.subr.bf16.mxu0 0
  %150 = vmatpush1.bf16.msra.mxu0 %v130
  %151 = vmatprep.subr.bf16.mxu0 0
  %152 = vmatpush1.bf16.msra.mxu0 %v131
  %153 = vmatprep.subr.bf16.mxu0 0
  %154 = vmatpush1.bf16.msra.mxu0 %v132
  %155 = vmatprep.subr.bf16.mxu0 0
  %156 = vmatpush1.bf16.msra.mxu0 %v133
  %157 = vmatprep.subr.bf16.mxu0 0
  %158 = vmatpush1.bf16.msra.mxu0 %v134
  %159 = vmatprep.subr.bf16.mxu0 0
  %160 = vmatpush1.bf16.msra.mxu0 0
  %161 = vmatprep.subr.bf16.mxu0 0
  %162 = vmatpush1.bf16.msra.mxu0 0
  %163 = vmatprep.subr.bf16.mxu0 0
  %164 = vmatpush1.bf16.msra.mxu0 0
  %165 = vmatprep.subr.bf16.mxu0 0
  %166 = vmatpush1.bf16.msra.mxu0 0
  %167 = vmatprep.subr.bf16.mxu0 0
  %168 = vmatpush1.bf16.msra.mxu0 0
  %169 = vmatprep.subr.bf16.mxu0 0
  %170 = vmatpush1.bf16.msra.mxu0 0
  %171 = vmatprep.subr.bf16.mxu0 0
  %172 = vmatpush1.bf16.msra.mxu0 0
  %173 = vmatprep.subr.bf16.mxu0 0
  %174 = vmatpush1.bf16.msra.mxu0 0
  %175 = vmatprep.mubr.bf16.mxu0 0
  %176 = vmatmul.mubr.bf16.gmra.mrb[0].mxu0 %v79
  %v177 = vpop.f32.mrb[0].mxu0
  %v178 = vadd.f32 0.0, %v177
  %v179 = vpop.f32.mrb[0].mxu0
  %v180 = vpop.f32.mrb[0].mxu0
  %v181 = vadd.f32 0.0, %v180
  %v182 = vpop.f32.mrb[0].mxu0
  %183 = vmatprep.mubr.bf16.mxu0 0
  %184 = vmatmul.mubr.bf16.gmra.mrb[0].mxu0 %v80
  %v185 = vpop.f32.mrb[0].mxu0
  %v186 = vadd.f32 0.0, %v185
  %v187 = vpop.f32.mrb[0].mxu0
  %v188 = vpop.f32.mrb[0].mxu0
  %v189 = vadd.f32 0.0, %v188
  %v190 = vpop.f32.mrb[0].mxu0
  %191 = vmatprep.mubr.bf16.mxu0 0
  %192 = vmatmul.mubr.bf16.gmra.mrb[0].mxu0 %v81
  %v193 = vpop.f32.mrb[0].mxu0
  %v194 = vadd.f32 0.0, %v193
  %v195 = vpop.f32.mrb[0].mxu0
  %v196 = vpop.f32.mrb[0].mxu0
  %v197 = vadd.f32 0.0, %v196
  %v198 = vpop.f32.mrb[0].mxu0
  %199 = vmatprep.mubr.bf16.mxu0 0
  %200 = vmatmul.mubr.bf16.gmra.mrb[0].mxu0 %v82
  %v201 = vpop.f32.mrb[0].mxu0
  %v202 = vadd.f32 0.0, %v201
  %v203 = vpop.f32.mrb[0].mxu0
  %v204 = vpop.f32.mrb[0].mxu0
  %v205 = vadd.f32 0.0, %v204
  %v206 = vpop.f32.mrb[0].mxu0
  %207 = vmatprep.mubr.bf16.mxu0 0
  %208 = vmatmul.mubr.bf16.gmra.mrb[0].mxu0 %v83
  %v209 = vpop.f32.mrb[0].mxu0
  %v210 = vadd.f32 0.0, %v209
  %v211 = vpop.f32.mrb[0].mxu0
  %v212 = vpop.f32.mrb[0].mxu0
  %v213 = vadd.f32 0.0, %v212
  %v214 = vpop.f32.mrb[0].mxu0
  %215 = vmatprep.mubr.bf16.mxu0 0
  %216 = vmatmul.mubr.bf16.gmra.mrb[0].mxu0 %v84
  %v217 = vpop.f32.mrb[0].mxu0
  %v218 = vadd.f32 0.0, %v217
  %v219 = vpop.f32.mrb[0].mxu0
  %v220 = vpop.f32.mrb[0].mxu0
  %v221 = vadd.f32 0.0, %v220
  %v222 = vpop.f32.mrb[0].mxu0
  %223 = vmatprep.mubr.bf16.mxu0 0
  %224 = vmatmul.mubr.bf16.gmra.mrb[0].mxu0 %v85
  %v225 = vpop.f32.mrb[0].mxu0
  %v226 = vadd.f32 0.0, %v225
  %v227 = vpop.f32.mrb[0].mxu0
  %v228 = vpop.f32.mrb[0].mxu0
  %v229 = vadd.f32 0.0, %v228
  %v230 = vpop.f32.mrb[0].mxu0
  %231 = vmatprep.mubr.bf16.mxu0 0
  %232 = vmatmul.mubr.bf16.gmra.mrb[0].mxu0 %v86
  %v233 = vpop.f32.mrb[0].mxu0
  %v234 = vadd.f32 0.0, %v233
  %v235 = vpop.f32.mrb[0].mxu0
  %v236 = vpop.f32.mrb[0].mxu0
  %v237 = vadd.f32 0.0, %v236
  %v238 = vpop.f32.mrb[0].mxu0
  %239 = vdwg.mxu0
  %v240 = vld [vmem:[%s2] sm:$0xff]
  %v241 = vld [vmem:[%s2 + $0x8] sm:$0xff]
  %v242 = vld [vmem:[%s2 + $0x10] sm:$0xff]
  %v243 = vld [vmem:[%s2 + $0x18] sm:$0xff]
  %v244 = vld [vmem:[%s2 + $0x20] sm:$0xff]
  %v245 = vld [vmem:[%s2 + $0x28] sm:$0xff]
  %v246 = vld [vmem:[%s2 + $0x30] sm:$0xff]
  %v247 = vld [vmem:[%s2 + $0x38] sm:$0xff]
  %v248 = vld [vmem:[%s2 + $0x40] sm:$0xff]
  %v249 = vld [vmem:[%s2 + $0x48] sm:$0xff]
  %v250 = vld [vmem:[%s2 + $0x50] sm:$0xff]
  %v251 = vld [vmem:[%s2 + $0x58] sm:$0xff]
  %v252 = vld [vmem:[%s2 + $0x60] sm:$0xff]
  %v253 = vld [vmem:[%s2 + $0x68] sm:$0xff]
  %v254 = vld [vmem:[%s2 + $0x70] sm:$0xff]
  %v255 = vld [vmem:[%s2 + $0x78] sm:$0xff]
  %257 = vset.pattern.permute.xlu0 0
  %258 = vperm.xlu0 %257, %v240
  %v259 = vpop.permute.xlu0 %258
  %262 = vset.pattern.permute.xlu0 0
  %263 = vperm.xlu0 %262, %v241
  %v264 = vpop.permute.xlu0 %263
  %267 = vset.pattern.permute.xlu0 0
  %268 = vperm.xlu0 %267, %v242
  %v269 = vpop.permute.xlu0 %268
  %272 = vset.pattern.permute.xlu0 0
  %273 = vperm.xlu0 %272, %v243
  %v274 = vpop.permute.xlu0 %273
  %277 = vset.pattern.permute.xlu0 0
  %278 = vperm.xlu0 %277, %v244
  %v279 = vpop.permute.xlu0 %278
  %282 = vset.pattern.permute.xlu0 0
  %283 = vperm.xlu0 %282, %v245
  %v284 = vpop.permute.xlu0 %283
  %287 = vset.pattern.permute.xlu0 0
  %288 = vperm.xlu0 %287, %v246
  %v289 = vpop.permute.xlu0 %288
  %292 = vset.pattern.permute.xlu0 0
  %293 = vperm.xlu0 %292, %v247
  %v294 = vpop.permute.xlu0 %293
  %297 = vset.pattern.permute.xlu0 0
  %298 = vperm.xlu0 %297, %v248
  %v299 = vpop.permute.xlu0 %298
  %302 = vset.pattern.permute.xlu0 0
  %303 = vperm.xlu0 %302, %v249
  %v304 = vpop.permute.xlu0 %303
  %307 = vset.pattern.permute.xlu0 0
  %308 = vperm.xlu0 %307, %v250
  %v309 = vpop.permute.xlu0 %308
  %312 = vset.pattern.permute.xlu0 0
  %313 = vperm.xlu0 %312, %v251
  %v314 = vpop.permute.xlu0 %313
  %317 = vset.pattern.permute.xlu0 0
  %318 = vperm.xlu0 %317, %v252
  %v319 = vpop.permute.xlu0 %318
  %322 = vset.pattern.permute.xlu0 0
  %323 = vperm.xlu0 %322, %v253
  %v324 = vpop.permute.xlu0 %323
  %327 = vset.pattern.permute.xlu0 0
  %328 = vperm.xlu0 %327, %v254
  %v329 = vpop.permute.xlu0 %328
  %332 = vset.pattern.permute.xlu0 0
  %333 = vperm.xlu0 %332, %v255
  %v334 = vpop.permute.xlu0 %333
  %v336 = vmul.f32 %v259, %v178
  %v337 = vmul.f32 %v264, %v181
  %v338 = vmul.f32 %v269, %v186
  %v339 = vmul.f32 %v274, %v189
  %v340 = vmul.f32 %v279, %v194
  %v341 = vmul.f32 %v284, %v197
  %v342 = vmul.f32 %v289, %v202
  %v343 = vmul.f32 %v294, %v205
  %v344 = vmul.f32 %v299, %v210
  %v345 = vmul.f32 %v304, %v213
  %v346 = vmul.f32 %v309, %v218
  %v347 = vmul.f32 %v314, %v221
  %v348 = vmul.f32 %v319, %v226
  %v349 = vmul.f32 %v324, %v229
  %v350 = vmul.f32 %v329, %v234
  %v351 = vmul.f32 %v334, %v237
  %v352 = vpack.c.bf16 %v337, %v336
  %v353 = vpack.c.bf16 %v339, %v338
  %v354 = vpack.c.bf16 %v341, %v340
  %v355 = vpack.c.bf16 %v343, %v342
  %v356 = vpack.c.bf16 %v345, %v344
  %v357 = vpack.c.bf16 %v347, %v346
  %v358 = vpack.c.bf16 %v349, %v348
  %v359 = vpack.c.bf16 %v351, %v350
  %v368 = vunpack.c.l.b16 %v352
  %v369 = vunpack.c.h.b16 %v352
  %v370 = vunpack.c.l.b16 %v353
  %v371 = vunpack.c.h.b16 %v353
  %v372 = vunpack.c.l.b16 %v354
  %v373 = vunpack.c.h.b16 %v354
  %v374 = vunpack.c.l.b16 %v355
  %v375 = vunpack.c.h.b16 %v355
  %v376 = vunpack.c.l.b16 %v356
  %v377 = vunpack.c.h.b16 %v356
  %v378 = vunpack.c.l.b16 %v357
  %v379 = vunpack.c.h.b16 %v357
  %v380 = vunpack.c.l.b16 %v358
  %v381 = vunpack.c.h.b16 %v358
  %v382 = vunpack.c.l.b16 %v359
  %v383 = vunpack.c.h.b16 %v359
  %v384 = vpack.c.b16 %v368, %v368
  %v385 = vpack.c.b16 %v369, %v369
  %v386 = vpack.c.b16 %v370, %v370
  %v387 = vpack.c.b16 %v371, %v371
  %v388 = vpack.c.b16 %v372, %v372
  %v389 = vpack.c.b16 %v373, %v373
  %v390 = vpack.c.b16 %v374, %v374
  %v391 = vpack.c.b16 %v375, %v375
  %v392 = vpack.c.b16 %v376, %v376
  %v393 = vpack.c.b16 %v377, %v377
  %v394 = vpack.c.b16 %v378, %v378
  %v395 = vpack.c.b16 %v379, %v379
  %v396 = vpack.c.b16 %v380, %v380
  %v397 = vpack.c.b16 %v381, %v381
  %v398 = vpack.c.b16 %v382, %v382
  %v399 = vpack.c.b16 %v383, %v383
  %416 = vst [vmem:[%s3] sm:$0xf] %v384
  %417 = vst [vmem:[%s3 + $0x4] sm:$0xf] %v385
  %418 = vst [vmem:[%s3 + $0x8] sm:$0xf] %v386
  %419 = vst [vmem:[%s3 + $0xc] sm:$0xf] %v387
  %420 = vst [vmem:[%s3 + $0x10] sm:$0xf] %v388
  %421 = vst [vmem:[%s3 + $0x14] sm:$0xf] %v389
  %422 = vst [vmem:[%s3 + $0x18] sm:$0xf] %v390
  %423 = vst [vmem:[%s3 + $0x1c] sm:$0xf] %v391
  %424 = vst [vmem:[%s3 + $0x20] sm:$0xf] %v392
  %425 = vst [vmem:[%s3 + $0x24] sm:$0xf] %v393
  %426 = vst [vmem:[%s3 + $0x28] sm:$0xf] %v394
  %427 = vst [vmem:[%s3 + $0x2c] sm:$0xf] %v395
  %428 = vst [vmem:[%s3 + $0x30] sm:$0xf] %v396
  %429 = vst [vmem:[%s3 + $0x34] sm:$0xf] %v397
  %430 = vst [vmem:[%s3 + $0x38] sm:$0xf] %v398
  %431 = vst [vmem:[%s3 + $0x3c] sm:$0xf] %v399
  // Predicated region
  $region14: #{gcn_forward.3} parent=0 // pred_check
    _
  $region15: #{gcn_forward.3} parent=0 // pred_check_branch
    %433 = sbr.rel (0) target = $region17
  $region16: #{gcn_forward.3} parent=0 // pred_region
    _
  $region17: #{gcn_forward.3} parent=0 // pred_fallthru
    _
  // Predicated region
  $region18: #{gcn_forward.3} parent=0 // pred_check
    _
  $region19: #{gcn_forward.3} parent=0 // pred_check_branch
    %435 = sbr.rel (0) target = $region21
  $region20: #{gcn_forward.3} parent=0 // pred_region
    _
  $region21: #{gcn_forward.3} parent=0 // pred_fallthru
    _

// kernel: gcn_forward.4
$region0: #{gcn_forward.4}
  #allocation0 [shape = 'u32[]', space=smem, size = 0x4, offset = 0x4, fixed_abs, tag = 'smem constant byte address 0x4 - core index']
  #allocation1 [shape = 'u32[144,128]{1,0:T(1,128)}', space=vmem, size = 0x12000, scoped, tag = 'internal scratch']
  #allocation2 [shape = 'f32[128,128]{1,0:T(8,128)}', space=vmem, size = 0x10000, scoped, tag = 'scratch operand']
  %s0 = inlined_call_operand.vmem [shape: s8[128,128], index: 0, kind: input, shape index: {}]
  %s1 = inlined_call_operand.vmem [shape: bf16[128,128], index: 1, kind: input, shape index: {}]
  %s2 = inlined_call_operand.vmem [shape: f32[128,1], index: 2, kind: input, shape index: {}]
  %s3 = inlined_call_operand.vmem [shape: f32[1,128], index: 3, kind: input, shape index: {}]
  %s4 = inlined_call_operand.vmem [shape: bf16[128,128], index: 4, kind: input, shape index: {}]
  %s5 = inlined_call_operand.vmem [shape: bf16[128,128], index: 5, kind: output, shape index: {}]
  %s6 = sld [smem:[#allocation0]]
  $region38: #{gcn_forward.4} parent=0
    _
  %s8 = ssub.s32 1, %s6
  %s9 = scalar_select 0, %s8, %s6
  // Predicated region
  $region2: #{gcn_forward.4} parent=0 // pred_check
    _
  $region3: #{gcn_forward.4} parent=0 // pred_check_branch
    %11 = sbr.rel (0) target = $region5
  $region4: #{gcn_forward.4} parent=0 // pred_region
    _
  $region5: #{gcn_forward.4} parent=0 // pred_fallthru
    _
  // Predicated region
  $region6: #{gcn_forward.4} parent=0 // pred_check
    _
  $region7: #{gcn_forward.4} parent=0 // pred_check_branch
    %13 = sbr.rel (0) target = $region9
  $region8: #{gcn_forward.4} parent=0 // pred_region
    _
  $region9: #{gcn_forward.4} parent=0 // pred_fallthru
    _
  // Predicated region
  $region10: #{gcn_forward.4} parent=0 // pred_check
    _
  $region11: #{gcn_forward.4} parent=0 // pred_check_branch
    %15 = sbr.rel (0) target = $region13
  $region12: #{gcn_forward.4} parent=0 // pred_region
    _
  $region13: #{gcn_forward.4} parent=0 // pred_fallthru
    _
  // Predicated region
  $region14: #{gcn_forward.4} parent=0 // pred_check
    _
  $region15: #{gcn_forward.4} parent=0 // pred_check_branch
    %17 = sbr.rel (0) target = $region17
  $region16: #{gcn_forward.4} parent=0 // pred_region
    _
  $region17: #{gcn_forward.4} parent=0 // pred_fallthru
    _
  // Predicated region
  $region18: #{gcn_forward.4} parent=0 // pred_check
    _
  $region19: #{gcn_forward.4} parent=0 // pred_check_branch
    %19 = sbr.rel (0) target = $region21
  $region20: #{gcn_forward.4} parent=0 // pred_region
    _
  $region21: #{gcn_forward.4} parent=0 // pred_fallthru
    _
  %p21 = scmp.eq.s32.totalorder 0, 0
  // Predicated region
  $region22: #{gcn_forward.4} parent=0 // pred_check
    %p22 = pneg %p21
  $region23: #{gcn_forward.4} parent=0 // pred_check_branch
    %24 = sbr.rel (%p22) target = $region25
  $region24: #{gcn_forward.4} parent=0 // pred_region
    %25 = vst [vmem:[#allocation2] sm:$0xff] 0.0
    %26 = vst [vmem:[#allocation2 + $0x8] sm:$0xff] 0.0
    %27 = vst [vmem:[#allocation2 + $0x10] sm:$0xff] 0.0
    %28 = vst [vmem:[#allocation2 + $0x18] sm:$0xff] 0.0
    %29 = vst [vmem:[#allocation2 + $0x20] sm:$0xff] 0.0
    %30 = vst [vmem:[#allocation2 + $0x28] sm:$0xff] 0.0
    %31 = vst [vmem:[#allocation2 + $0x30] sm:$0xff] 0.0
    %32 = vst [vmem:[#allocation2 + $0x38] sm:$0xff] 0.0
    %33 = vst [vmem:[#allocation2 + $0x40] sm:$0xff] 0.0
    %34 = vst [vmem:[#allocation2 + $0x48] sm:$0xff] 0.0
    %35 = vst [vmem:[#allocation2 + $0x50] sm:$0xff] 0.0
    %36 = vst [vmem:[#allocation2 + $0x58] sm:$0xff] 0.0
    %37 = vst [vmem:[#allocation2 + $0x60] sm:$0xff] 0.0
    %38 = vst [vmem:[#allocation2 + $0x68] sm:$0xff] 0.0
    %39 = vst [vmem:[#allocation2 + $0x70] sm:$0xff] 0.0
    %40 = vst [vmem:[#allocation2 + $0x78] sm:$0xff] 0.0
  $region25: #{gcn_forward.4} parent=0 // pred_fallthru
    _
  %s41 = smul.u32 0, 128
  %s42 = sshra.s32 %s41, 3
  %s43 = sand.u32 %s41, 7
  %s44 = smul.addr %s42, 4
  %s45 = scalar_lea.vmem %s1, %s44
  %v46 = vld [vmem:[%s45] sm:$0xf]
  %v47 = vld [vmem:[%s45 + $0x4] sm:$0xf]
  %v48 = vld [vmem:[%s45 + $0x8] sm:$0xf]
  %v49 = vld [vmem:[%s45 + $0xc] sm:$0xf]
  %v50 = vld [vmem:[%s45 + $0x10] sm:$0xf]
  %v51 = vld [vmem:[%s45 + $0x14] sm:$0xf]
  %v52 = vld [vmem:[%s45 + $0x18] sm:$0xf]
  %v53 = vld [vmem:[%s45 + $0x1c] sm:$0xf]
  %v54 = vld [vmem:[%s45 + $0x20] sm:$0xf]
  %v55 = vld [vmem:[%s45 + $0x24] sm:$0xf]
  %v56 = vld [vmem:[%s45 + $0x28] sm:$0xf]
  %v57 = vld [vmem:[%s45 + $0x2c] sm:$0xf]
  %v58 = vld [vmem:[%s45 + $0x30] sm:$0xf]
  %v59 = vld [vmem:[%s45 + $0x34] sm:$0xf]
  %v60 = vld [vmem:[%s45 + $0x38] sm:$0xf]
  %v61 = vld [vmem:[%s45 + $0x3c] sm:$0xf]
  %v62 = vld [vmem:[%s0] sm:$0xff]
  %v63 = vld [vmem:[%s0 + $0x8] sm:$0xff]
  %v64 = vld [vmem:[%s0 + $0x10] sm:$0xff]
  %v65 = vld [vmem:[%s0 + $0x18] sm:$0xff]
  %v66 = vunpack.c.l.s8.bf16 %v62
  %v67 = vunpack.c.h.s8.bf16 %v62
  %v68 = vunpack.c.l.s8.bf16 %v63
  %v69 = vunpack.c.h.s8.bf16 %v63
  %v70 = vunpack.c.l.s8.bf16 %v64
  %v71 = vunpack.c.h.s8.bf16 %v64
  %v72 = vunpack.c.l.s8.bf16 %v65
  %v73 = vunpack.c.h.s8.bf16 %v65
  %v74 = vld [vmem:[#allocation2] sm:$0xff]
  %v75 = vld [vmem:[#allocation2 + $0x8] sm:$0xff]
  %v76 = vld [vmem:[#allocation2 + $0x10] sm:$0xff]
  %v77 = vld [vmem:[#allocation2 + $0x18] sm:$0xff]
  %v78 = vld [vmem:[#allocation2 + $0x20] sm:$0xff]
  %v79 = vld [vmem:[#allocation2 + $0x28] sm:$0xff]
  %v80 = vld [vmem:[#allocation2 + $0x30] sm:$0xff]
  %v81 = vld [vmem:[#allocation2 + $0x38] sm:$0xff]
  %v82 = vld [vmem:[#allocation2 + $0x40] sm:$0xff]
  %v83 = vld [vmem:[#allocation2 + $0x48] sm:$0xff]
  %v84 = vld [vmem:[#allocation2 + $0x50] sm:$0xff]
  %v85 = vld [vmem:[#allocation2 + $0x58] sm:$0xff]
  %v86 = vld [vmem:[#allocation2 + $0x60] sm:$0xff]
  %v87 = vld [vmem:[#allocation2 + $0x68] sm:$0xff]
  %v88 = vld [vmem:[#allocation2 + $0x70] sm:$0xff]
  %v89 = vld [vmem:[#allocation2 + $0x78] sm:$0xff]
  %v106 = vunpack.c.l.b16 %v46
  %v107 = vunpack.c.l.b16 %v47
  %v108 = vunpack.c.l.b16 %v48
  %v109 = vunpack.c.l.b16 %v49
  %v110 = vunpack.c.l.b16 %v50
  %v111 = vunpack.c.l.b16 %v51
  %v112 = vunpack.c.l.b16 %v52
  %v113 = vunpack.c.l.b16 %v53
  %v114 = vunpack.c.l.b16 %v54
  %v115 = vunpack.c.l.b16 %v55
  %v116 = vunpack.c.l.b16 %v56
  %v117 = vunpack.c.l.b16 %v57
  %v118 = vunpack.c.l.b16 %v58
  %v119 = vunpack.c.l.b16 %v59
  %v120 = vunpack.c.l.b16 %v60
  %v121 = vunpack.c.l.b16 %v61
  %v122 = vpack.c.b16 %v107, %v106
  %v123 = vpack.c.b16 %v109, %v108
  %v124 = vpack.c.b16 %v111, %v110
  %v125 = vpack.c.b16 %v113, %v112
  %v126 = vpack.c.b16 %v115, %v114
  %v127 = vpack.c.b16 %v117, %v116
  %v128 = vpack.c.b16 %v119, %v118
  %v129 = vpack.c.b16 %v121, %v120
  %138 = vmatprep.subr.bf16.mxu0 0
  %139 = vmatpush1.bf16.msra.mxu0 %v122
  %140 = vmatprep.subr.bf16.mxu0 0
  %141 = vmatpush1.bf16.msra.mxu0 %v123
  %142 = vmatprep.subr.bf16.mxu0 0
  %143 = vmatpush1.bf16.msra.mxu0 %v124
  %144 = vmatprep.subr.bf16.mxu0 0
  %145 = vmatpush1.bf16.msra.mxu0 %v125
  %146 = vmatprep.subr.bf16.mxu0 0
  %147 = vmatpush1.bf16.msra.mxu0 %v126
  %148 = vmatprep.subr.bf16.mxu0 0
  %149 = vmatpush1.bf16.msra.mxu0 %v127
  %150 = vmatprep.subr.bf16.mxu0 0
  %151 = vmatpush1.bf16.msra.mxu0 %v128
  %152 = vmatprep.subr.bf16.mxu0 0
  %153 = vmatpush1.bf16.msra.mxu0 %v129
  %154 = vmatprep.subr.bf16.mxu0 0
  %155 = vmatpush1.bf16.msra.mxu0 0
  %156 = vmatprep.subr.bf16.mxu0 0
  %157 = vmatpush1.bf16.msra.mxu0 0
  %158 = vmatprep.subr.bf16.mxu0 0
  %159 = vmatpush1.bf16.msra.mxu0 0
  %160 = vmatprep.subr.bf16.mxu0 0
  %161 = vmatpush1.bf16.msra.mxu0 0
  %162 = vmatprep.subr.bf16.mxu0 0
  %163 = vmatpush1.bf16.msra.mxu0 0
  %164 = vmatprep.subr.bf16.mxu0 0
  %165 = vmatpush1.bf16.msra.mxu0 0
  %166 = vmatprep.subr.bf16.mxu0 0
  %167 = vmatpush1.bf16.msra.mxu0 0
  %168 = vmatprep.subr.bf16.mxu0 0
  %169 = vmatpush1.bf16.msra.mxu0 0
  %170 = vmatprep.mubr.bf16.mxu0 0
  %171 = vmatmul.mubr.bf16.gmra.mrb[0].mxu0 %v66
  %v172 = vpop.f32.mrb[0].mxu0
  %v173 = vadd.f32 0.0, %v172
  %v174 = vpop.f32.mrb[0].mxu0
  %v175 = vpop.f32.mrb[0].mxu0
  %v176 = vadd.f32 0.0, %v175
  %v177 = vpop.f32.mrb[0].mxu0
  %178 = vmatprep.mubr.bf16.mxu0 0
  %179 = vmatmul.mubr.bf16.gmra.mrb[0].mxu0 %v67
  %v180 = vpop.f32.mrb[0].mxu0
  %v181 = vadd.f32 0.0, %v180
  %v182 = vpop.f32.mrb[0].mxu0
  %v183 = vpop.f32.mrb[0].mxu0
  %v184 = vadd.f32 0.0, %v183
  %v185 = vpop.f32.mrb[0].mxu0
  %186 = vmatprep.mubr.bf16.mxu0 0
  %187 = vmatmul.mubr.bf16.gmra.mrb[0].mxu0 %v68
  %v188 = vpop.f32.mrb[0].mxu0
  %v189 = vadd.f32 0.0, %v188
  %v190 = vpop.f32.mrb[0].mxu0
  %v191 = vpop.f32.mrb[0].mxu0
  %v192 = vadd.f32 0.0, %v191
  %v193 = vpop.f32.mrb[0].mxu0
  %194 = vmatprep.mubr.bf16.mxu0 0
  %195 = vmatmul.mubr.bf16.gmra.mrb[0].mxu0 %v69
  %v196 = vpop.f32.mrb[0].mxu0
  %v197 = vadd.f32 0.0, %v196
  %v198 = vpop.f32.mrb[0].mxu0
  %v199 = vpop.f32.mrb[0].mxu0
  %v200 = vadd.f32 0.0, %v199
  %v201 = vpop.f32.mrb[0].mxu0
  %202 = vmatprep.mubr.bf16.mxu0 0
  %203 = vmatmul.mubr.bf16.gmra.mrb[0].mxu0 %v70
  %v204 = vpop.f32.mrb[0].mxu0
  %v205 = vadd.f32 0.0, %v204
  %v206 = vpop.f32.mrb[0].mxu0
  %v207 = vpop.f32.mrb[0].mxu0
  %v208 = vadd.f32 0.0, %v207
  %v209 = vpop.f32.mrb[0].mxu0
  %210 = vmatprep.mubr.bf16.mxu0 0
  %211 = vmatmul.mubr.bf16.gmra.mrb[0].mxu0 %v71
  %v212 = vpop.f32.mrb[0].mxu0
  %v213 = vadd.f32 0.0, %v212
  %v214 = vpop.f32.mrb[0].mxu0
  %v215 = vpop.f32.mrb[0].mxu0
  %v216 = vadd.f32 0.0, %v215
  %v217 = vpop.f32.mrb[0].mxu0
  %218 = vmatprep.mubr.bf16.mxu0 0
  %219 = vmatmul.mubr.bf16.gmra.mrb[0].mxu0 %v72
  %v220 = vpop.f32.mrb[0].mxu0
  %v221 = vadd.f32 0.0, %v220
  %v222 = vpop.f32.mrb[0].mxu0
  %v223 = vpop.f32.mrb[0].mxu0
  %v224 = vadd.f32 0.0, %v223
  %v225 = vpop.f32.mrb[0].mxu0
  %226 = vmatprep.mubr.bf16.mxu0 0
  %227 = vmatmul.mubr.bf16.gmra.mrb[0].mxu0 %v73
  %v228 = vpop.f32.mrb[0].mxu0
  %v229 = vadd.f32 0.0, %v228
  %v230 = vpop.f32.mrb[0].mxu0
  %v231 = vpop.f32.mrb[0].mxu0
  %v232 = vadd.f32 0.0, %v231
  %v233 = vpop.f32.mrb[0].mxu0
  %234 = vdwg.mxu0
  %v235 = vadd.f32 %v74, %v173
  %v236 = vadd.f32 %v75, %v176
  %v237 = vadd.f32 %v76, %v181
  %v238 = vadd.f32 %v77, %v184
  %v239 = vadd.f32 %v78, %v189
  %v240 = vadd.f32 %v79, %v192
  %v241 = vadd.f32 %v80, %v197
  %v242 = vadd.f32 %v81, %v200
  %v243 = vadd.f32 %v82, %v205
  %v244 = vadd.f32 %v83, %v208
  %v245 = vadd.f32 %v84, %v213
  %v246 = vadd.f32 %v85, %v216
  %v247 = vadd.f32 %v86, %v221
  %v248 = vadd.f32 %v87, %v224
  %v249 = vadd.f32 %v88, %v229
  %v250 = vadd.f32 %v89, %v232
  %251 = vst [vmem:[#allocation2] sm:$0xff] %v235
  %252 = vst [vmem:[#allocation2 + $0x8] sm:$0xff] %v236
  %253 = vst [vmem:[#allocation2 + $0x10] sm:$0xff] %v237
  %254 = vst [vmem:[#allocation2 + $0x18] sm:$0xff] %v238
  %255 = vst [vmem:[#allocation2 + $0x20] sm:$0xff] %v239
  %256 = vst [vmem:[#allocation2 + $0x28] sm:$0xff] %v240
  %257 = vst [vmem:[#allocation2 + $0x30] sm:$0xff] %v241
  %258 = vst [vmem:[#allocation2 + $0x38] sm:$0xff] %v242
  %259 = vst [vmem:[#allocation2 + $0x40] sm:$0xff] %v243
  %260 = vst [vmem:[#allocation2 + $0x48] sm:$0xff] %v244
  %261 = vst [vmem:[#allocation2 + $0x50] sm:$0xff] %v245
  %262 = vst [vmem:[#allocation2 + $0x58] sm:$0xff] %v246
  %263 = vst [vmem:[#allocation2 + $0x60] sm:$0xff] %v247
  %264 = vst [vmem:[#allocation2 + $0x68] sm:$0xff] %v248
  %265 = vst [vmem:[#allocation2 + $0x70] sm:$0xff] %v249
  %266 = vst [vmem:[#allocation2 + $0x78] sm:$0xff] %v250
  // Predicated region
  $region26: #{gcn_forward.4} parent=0 // pred_check
    %p267 = pneg %p21
  $region27: #{gcn_forward.4} parent=0 // pred_check_branch
    %269 = sbr.rel (%p267) target = $region29
  $region28: #{gcn_forward.4} parent=0 // pred_region
    %v270 = vld [vmem:[%s2] sm:$0xff]
    %v271 = vld [vmem:[%s2 + $0x8] sm:$0xff]
    %v272 = vld [vmem:[%s2 + $0x10] sm:$0xff]
    %v273 = vld [vmem:[%s2 + $0x18] sm:$0xff]
    %v274 = vld [vmem:[%s2 + $0x20] sm:$0xff]
    %v275 = vld [vmem:[%s2 + $0x28] sm:$0xff]
    %v276 = vld [vmem:[%s2 + $0x30] sm:$0xff]
    %v277 = vld [vmem:[%s2 + $0x38] sm:$0xff]
    %v278 = vld [vmem:[%s2 + $0x40] sm:$0xff]
    %v279 = vld [vmem:[%s2 + $0x48] sm:$0xff]
    %v280 = vld [vmem:[%s2 + $0x50] sm:$0xff]
    %v281 = vld [vmem:[%s2 + $0x58] sm:$0xff]
    %v282 = vld [vmem:[%s2 + $0x60] sm:$0xff]
    %v283 = vld [vmem:[%s2 + $0x68] sm:$0xff]
    %v284 = vld [vmem:[%s2 + $0x70] sm:$0xff]
    %v285 = vld [vmem:[%s2 + $0x78] sm:$0xff]
    %v286 = vld [vmem:[#allocation2] sm:$0xff]
    %v287 = vld [vmem:[#allocation2 + $0x8] sm:$0xff]
    %v288 = vld [vmem:[#allocation2 + $0x10] sm:$0xff]
    %v289 = vld [vmem:[#allocation2 + $0x18] sm:$0xff]
    %v290 = vld [vmem:[#allocation2 + $0x20] sm:$0xff]
    %v291 = vld [vmem:[#allocation2 + $0x28] sm:$0xff]
    %v292 = vld [vmem:[#allocation2 + $0x30] sm:$0xff]
    %v293 = vld [vmem:[#allocation2 + $0x38] sm:$0xff]
    %v294 = vld [vmem:[#allocation2 + $0x40] sm:$0xff]
    %v295 = vld [vmem:[#allocation2 + $0x48] sm:$0xff]
    %v296 = vld [vmem:[#allocation2 + $0x50] sm:$0xff]
    %v297 = vld [vmem:[#allocation2 + $0x58] sm:$0xff]
    %v298 = vld [vmem:[#allocation2 + $0x60] sm:$0xff]
    %v299 = vld [vmem:[#allocation2 + $0x68] sm:$0xff]
    %v300 = vld [vmem:[#allocation2 + $0x70] sm:$0xff]
    %v301 = vld [vmem:[#allocation2 + $0x78] sm:$0xff]
    %303 = vset.pattern.permute.xlu0 0
    %304 = vperm.xlu0 %303, %v270
    %v305 = vpop.permute.xlu0 %304
    %308 = vset.pattern.permute.xlu0 0
    %309 = vperm.xlu0 %308, %v271
    %v310 = vpop.permute.xlu0 %309
    %313 = vset.pattern.permute.xlu0 0
    %314 = vperm.xlu0 %313, %v272
    %v315 = vpop.permute.xlu0 %314
    %318 = vset.pattern.permute.xlu0 0
    %319 = vperm.xlu0 %318, %v273
    %v320 = vpop.permute.xlu0 %319
    %323 = vset.pattern.permute.xlu0 0
    %324 = vperm.xlu0 %323, %v274
    %v325 = vpop.permute.xlu0 %324
    %328 = vset.pattern.permute.xlu0 0
    %329 = vperm.xlu0 %328, %v275
    %v330 = vpop.permute.xlu0 %329
    %333 = vset.pattern.permute.xlu0 0
    %334 = vperm.xlu0 %333, %v276
    %v335 = vpop.permute.xlu0 %334
    %338 = vset.pattern.permute.xlu0 0
    %339 = vperm.xlu0 %338, %v277
    %v340 = vpop.permute.xlu0 %339
    %343 = vset.pattern.permute.xlu0 0
    %344 = vperm.xlu0 %343, %v278
    %v345 = vpop.permute.xlu0 %344
    %348 = vset.pattern.permute.xlu0 0
    %349 = vperm.xlu0 %348, %v279
    %v350 = vpop.permute.xlu0 %349
    %353 = vset.pattern.permute.xlu0 0
    %354 = vperm.xlu0 %353, %v280
    %v355 = vpop.permute.xlu0 %354
    %358 = vset.pattern.permute.xlu0 0
    %359 = vperm.xlu0 %358, %v281
    %v360 = vpop.permute.xlu0 %359
    %363 = vset.pattern.permute.xlu0 0
    %364 = vperm.xlu0 %363, %v282
    %v365 = vpop.permute.xlu0 %364
    %368 = vset.pattern.permute.xlu0 0
    %369 = vperm.xlu0 %368, %v283
    %v370 = vpop.permute.xlu0 %369
    %373 = vset.pattern.permute.xlu0 0
    %374 = vperm.xlu0 %373, %v284
    %v375 = vpop.permute.xlu0 %374
    %378 = vset.pattern.permute.xlu0 0
    %379 = vperm.xlu0 %378, %v285
    %v380 = vpop.permute.xlu0 %379
    %v382 = vmul.f32 %v305, %v286
    %v383 = vmul.f32 %v310, %v287
    %v384 = vmul.f32 %v315, %v288
    %v385 = vmul.f32 %v320, %v289
    %v386 = vmul.f32 %v325, %v290
    %v387 = vmul.f32 %v330, %v291
    %v388 = vmul.f32 %v335, %v292
    %v389 = vmul.f32 %v340, %v293
    %v390 = vmul.f32 %v345, %v294
    %v391 = vmul.f32 %v350, %v295
    %v392 = vmul.f32 %v355, %v296
    %v393 = vmul.f32 %v360, %v297
    %v394 = vmul.f32 %v365, %v298
    %v395 = vmul.f32 %v370, %v299
    %v396 = vmul.f32 %v375, %v300
    %v397 = vmul.f32 %v380, %v301
    %v398 = vld [vmem:[%s3] sm:$0x1]
    %v400 = vlaneseq
    %v401 = vshrl.u32 %v400, 7
    %v402 = vsub.s32 0, %v401
    %v403 = vrot.slane %v398, %v402
    %v405 = vadd.f32 %v382, %v403
    %v406 = vadd.f32 %v383, %v403
    %v407 = vadd.f32 %v384, %v403
    %v408 = vadd.f32 %v385, %v403
    %v409 = vadd.f32 %v386, %v403
    %v410 = vadd.f32 %v387, %v403
    %v411 = vadd.f32 %v388, %v403
    %v412 = vadd.f32 %v389, %v403
    %v413 = vadd.f32 %v390, %v403
    %v414 = vadd.f32 %v391, %v403
    %v415 = vadd.f32 %v392, %v403
    %v416 = vadd.f32 %v393, %v403
    %v417 = vadd.f32 %v394, %v403
    %v418 = vadd.f32 %v395, %v403
    %v419 = vadd.f32 %v396, %v403
    %v420 = vadd.f32 %v397, %v403
    %v421 = vmax.f32 %v405, 0.0
    %v422 = vmax.f32 %v406, 0.0
    %v423 = vmax.f32 %v407, 0.0
    %v424 = vmax.f32 %v408, 0.0
    %v425 = vmax.f32 %v409, 0.0
    %v426 = vmax.f32 %v410, 0.0
    %v427 = vmax.f32 %v411, 0.0
    %v428 = vmax.f32 %v412, 0.0
    %v429 = vmax.f32 %v413, 0.0
    %v430 = vmax.f32 %v414, 0.0
    %v431 = vmax.f32 %v415, 0.0
    %v432 = vmax.f32 %v416, 0.0
    %v433 = vmax.f32 %v417, 0.0
    %v434 = vmax.f32 %v418, 0.0
    %v435 = vmax.f32 %v419, 0.0
    %v436 = vmax.f32 %v420, 0.0
    %v437 = vpack.c.bf16 %v422, %v421
    %v438 = vpack.c.bf16 %v424, %v423
    %v439 = vpack.c.bf16 %v426, %v425
    %v440 = vpack.c.bf16 %v428, %v427
    %v441 = vpack.c.bf16 %v430, %v429
    %v442 = vpack.c.bf16 %v432, %v431
    %v443 = vpack.c.bf16 %v434, %v433
    %v444 = vpack.c.bf16 %v436, %v435
    %v445 = vld [vmem:[%s4] sm:$0xf]
    %v446 = vld [vmem:[%s4 + $0x4] sm:$0xf]
    %v447 = vld [vmem:[%s4 + $0x8] sm:$0xf]
    %v448 = vld [vmem:[%s4 + $0xc] sm:$0xf]
    %v449 = vld [vmem:[%s4 + $0x10] sm:$0xf]
    %v450 = vld [vmem:[%s4 + $0x14] sm:$0xf]
    %v451 = vld [vmem:[%s4 + $0x18] sm:$0xf]
    %v452 = vld [vmem:[%s4 + $0x1c] sm:$0xf]
    %v453 = vld [vmem:[%s4 + $0x20] sm:$0xf]
    %v454 = vld [vmem:[%s4 + $0x24] sm:$0xf]
    %v455 = vld [vmem:[%s4 + $0x28] sm:$0xf]
    %v456 = vld [vmem:[%s4 + $0x2c] sm:$0xf]
    %v457 = vld [vmem:[%s4 + $0x30] sm:$0xf]
    %v458 = vld [vmem:[%s4 + $0x34] sm:$0xf]
    %v459 = vld [vmem:[%s4 + $0x38] sm:$0xf]
    %v460 = vld [vmem:[%s4 + $0x3c] sm:$0xf]
    %v477 = vunpack.c.l.b16 %v445
    %v478 = vunpack.c.l.b16 %v446
    %v479 = vunpack.c.l.b16 %v447
    %v480 = vunpack.c.l.b16 %v448
    %v481 = vunpack.c.l.b16 %v449
    %v482 = vunpack.c.l.b16 %v450
    %v483 = vunpack.c.l.b16 %v451
    %v484 = vunpack.c.l.b16 %v452
    %v485 = vunpack.c.l.b16 %v453
    %v486 = vunpack.c.l.b16 %v454
    %v487 = vunpack.c.l.b16 %v455
    %v488 = vunpack.c.l.b16 %v456
    %v489 = vunpack.c.l.b16 %v457
    %v490 = vunpack.c.l.b16 %v458
    %v491 = vunpack.c.l.b16 %v459
    %v492 = vunpack.c.l.b16 %v460
    %v493 = vpack.c.b16 %v478, %v477
    %v494 = vpack.c.b16 %v480, %v479
    %v495 = vpack.c.b16 %v482, %v481
    %v496 = vpack.c.b16 %v484, %v483
    %v497 = vpack.c.b16 %v486, %v485
    %v498 = vpack.c.b16 %v488, %v487
    %v499 = vpack.c.b16 %v490, %v489
    %v500 = vpack.c.b16 %v492, %v491
    %509 = vmatprep.subr.bf16.mxu0 0
    %510 = vmatpush1.bf16.msra.mxu0 %v493
    %511 = vmatprep.subr.bf16.mxu0 0
    %512 = vmatpush1.bf16.msra.mxu0 %v494
    %513 = vmatprep.subr.bf16.mxu0 0
    %514 = vmatpush1.bf16.msra.mxu0 %v495
    %515 = vmatprep.subr.bf16.mxu0 0
    %516 = vmatpush1.bf16.msra.mxu0 %v496
    %517 = vmatprep.subr.bf16.mxu0 0
    %518 = vmatpush1.bf16.msra.mxu0 %v497
    %519 = vmatprep.subr.bf16.mxu0 0
    %520 = vmatpush1.bf16.msra.mxu0 %v498
    %521 = vmatprep.subr.bf16.mxu0 0
    %522 = vmatpush1.bf16.msra.mxu0 %v499
    %523 = vmatprep.subr.bf16.mxu0 0
    %524 = vmatpush1.bf16.msra.mxu0 %v500
    %525 = vmatprep.subr.bf16.mxu0 0
    %526 = vmatpush1.bf16.msra.mxu0 0
    %527 = vmatprep.subr.bf16.mxu0 0
    %528 = vmatpush1.bf16.msra.mxu0 0
    %529 = vmatprep.subr.bf16.mxu0 0
    %530 = vmatpush1.bf16.msra.mxu0 0
    %531 = vmatprep.subr.bf16.mxu0 0
    %532 = vmatpush1.bf16.msra.mxu0 0
    %533 = vmatprep.subr.bf16.mxu0 0
    %534 = vmatpush1.bf16.msra.mxu0 0
    %535 = vmatprep.subr.bf16.mxu0 0
    %536 = vmatpush1.bf16.msra.mxu0 0
    %537 = vmatprep.subr.bf16.mxu0 0
    %538 = vmatpush1.bf16.msra.mxu0 0
    %539 = vmatprep.subr.bf16.mxu0 0
    %540 = vmatpush1.bf16.msra.mxu0 0
    %541 = vmatprep.mubr.bf16.mxu0 0
    %542 = vmatmul.mubr.bf16.gmra.mrb[0].mxu0 %v437
    %v543 = vpop.f32.mrb[0].mxu0
    %v544 = vadd.f32 0.0, %v543
    %v545 = vpop.f32.mrb[0].mxu0
    %v546 = vpop.f32.mrb[0].mxu0
    %v547 = vadd.f32 0.0, %v546
    %v548 = vpop.f32.mrb[0].mxu0
    %549 = vmatprep.mubr.bf16.mxu0 0
    %550 = vmatmul.mubr.bf16.gmra.mrb[0].mxu0 %v438
    %v551 = vpop.f32.mrb[0].mxu0
    %v552 = vadd.f32 0.0, %v551
    %v553 = vpop.f32.mrb[0].mxu0
    %v554 = vpop.f32.mrb[0].mxu0
    %v555 = vadd.f32 0.0, %v554
    %v556 = vpop.f32.mrb[0].mxu0
    %557 = vmatprep.mubr.bf16.mxu0 0
    %558 = vmatmul.mubr.bf16.gmra.mrb[0].mxu0 %v439
    %v559 = vpop.f32.mrb[0].mxu0
    %v560 = vadd.f32 0.0, %v559
    %v561 = vpop.f32.mrb[0].mxu0
    %v562 = vpop.f32.mrb[0].mxu0
    %v563 = vadd.f32 0.0, %v562
    %v564 = vpop.f32.mrb[0].mxu0
    %565 = vmatprep.mubr.bf16.mxu0 0
    %566 = vmatmul.mubr.bf16.gmra.mrb[0].mxu0 %v440
    %v567 = vpop.f32.mrb[0].mxu0
    %v568 = vadd.f32 0.0, %v567
    %v569 = vpop.f32.mrb[0].mxu0
    %v570 = vpop.f32.mrb[0].mxu0
    %v571 = vadd.f32 0.0, %v570
    %v572 = vpop.f32.mrb[0].mxu0
    %573 = vmatprep.mubr.bf16.mxu0 0
    %574 = vmatmul.mubr.bf16.gmra.mrb[0].mxu0 %v441
    %v575 = vpop.f32.mrb[0].mxu0
    %v576 = vadd.f32 0.0, %v575
    %v577 = vpop.f32.mrb[0].mxu0
    %v578 = vpop.f32.mrb[0].mxu0
    %v579 = vadd.f32 0.0, %v578
    %v580 = vpop.f32.mrb[0].mxu0
    %581 = vmatprep.mubr.bf16.mxu0 0
    %582 = vmatmul.mubr.bf16.gmra.mrb[0].mxu0 %v442
    %v583 = vpop.f32.mrb[0].mxu0
    %v584 = vadd.f32 0.0, %v583
    %v585 = vpop.f32.mrb[0].mxu0
    %v586 = vpop.f32.mrb[0].mxu0
    %v587 = vadd.f32 0.0, %v586
    %v588 = vpop.f32.mrb[0].mxu0
    %589 = vmatprep.mubr.bf16.mxu0 0
    %590 = vmatmul.mubr.bf16.gmra.mrb[0].mxu0 %v443
    %v591 = vpop.f32.mrb[0].mxu0
    %v592 = vadd.f32 0.0, %v591
    %v593 = vpop.f32.mrb[0].mxu0
    %v594 = vpop.f32.mrb[0].mxu0
    %v595 = vadd.f32 0.0, %v594
    %v596 = vpop.f32.mrb[0].mxu0
    %597 = vmatprep.mubr.bf16.mxu0 0
    %598 = vmatmul.mubr.bf16.gmra.mrb[0].mxu0 %v444
    %v599 = vpop.f32.mrb[0].mxu0
    %v600 = vadd.f32 0.0, %v599
    %v601 = vpop.f32.mrb[0].mxu0
    %v602 = vpop.f32.mrb[0].mxu0
    %v603 = vadd.f32 0.0, %v602
    %v604 = vpop.f32.mrb[0].mxu0
    %605 = vdwg.mxu0
    %v606 = vmul.f32 %v305, %v544
    %v607 = vmul.f32 %v310, %v547
    %v608 = vmul.f32 %v315, %v552
    %v609 = vmul.f32 %v320, %v555
    %v610 = vmul.f32 %v325, %v560
    %v611 = vmul.f32 %v330, %v563
    %v612 = vmul.f32 %v335, %v568
    %v613 = vmul.f32 %v340, %v571
    %v614 = vmul.f32 %v345, %v576
    %v615 = vmul.f32 %v350, %v579
    %v616 = vmul.f32 %v355, %v584
    %v617 = vmul.f32 %v360, %v587
    %v618 = vmul.f32 %v365, %v592
    %v619 = vmul.f32 %v370, %v595
    %v620 = vmul.f32 %v375, %v600
    %v621 = vmul.f32 %v380, %v603
    %v622 = vpack.c.bf16 %v607, %v606
    %v623 = vpack.c.bf16 %v609, %v608
    %v624 = vpack.c.bf16 %v611, %v610
    %v625 = vpack.c.bf16 %v613, %v612
    %v626 = vpack.c.bf16 %v615, %v614
    %v627 = vpack.c.bf16 %v617, %v616
    %v628 = vpack.c.bf16 %v619, %v618
    %v629 = vpack.c.bf16 %v621, %v620
    %v638 = vunpack.c.l.b16 %v622
    %v639 = vunpack.c.h.b16 %v622
    %v640 = vunpack.c.l.b16 %v623
    %v641 = vunpack.c.h.b16 %v623
    %v642 = vunpack.c.l.b16 %v624
    %v643 = vunpack.c.h.b16 %v624
    %v644 = vunpack.c.l.b16 %v625
    %v645 = vunpack.c.h.b16 %v625
    %v646 = vunpack.c.l.b16 %v626
    %v647 = vunpack.c.h.b16 %v626
    %v648 = vunpack.c.l.b16 %v627
    %v649 = vunpack.c.h.b16 %v627
    %v650 = vunpack.c.l.b16 %v628
    %v651 = vunpack.c.h.b16 %v628
    %v652 = vunpack.c.l.b16 %v629
    %v653 = vunpack.c.h.b16 %v629
    %v654 = vpack.c.b16 %v638, %v638
    %v655 = vpack.c.b16 %v639, %v639
    %v656 = vpack.c.b16 %v640, %v640
    %v657 = vpack.c.b16 %v641, %v641
    %v658 = vpack.c.b16 %v642, %v642
    %v659 = vpack.c.b16 %v643, %v643
    %v660 = vpack.c.b16 %v644, %v644
    %v661 = vpack.c.b16 %v645, %v645
    %v662 = vpack.c.b16 %v646, %v646
    %v663 = vpack.c.b16 %v647, %v647
    %v664 = vpack.c.b16 %v648, %v648
    %v665 = vpack.c.b16 %v649, %v649
    %v666 = vpack.c.b16 %v650, %v650
    %v667 = vpack.c.b16 %v651, %v651
    %v668 = vpack.c.b16 %v652, %v652
    %v669 = vpack.c.b16 %v653, %v653
    %686 = vst [vmem:[%s5] sm:$0xf] %v654
    %687 = vst [vmem:[%s5 + $0x4] sm:$0xf] %v655
    %688 = vst [vmem:[%s5 + $0x8] sm:$0xf] %v656
    %689 = vst [vmem:[%s5 + $0xc] sm:$0xf] %v657
    %690 = vst [vmem:[%s5 + $0x10] sm:$0xf] %v658
    %691 = vst [vmem:[%s5 + $0x14] sm:$0xf] %v659
    %692 = vst [vmem:[%s5 + $0x18] sm:$0xf] %v660
    %693 = vst [vmem:[%s5 + $0x1c] sm:$0xf] %v661
    %694 = vst [vmem:[%s5 + $0x20] sm:$0xf] %v662
    %695 = vst [vmem:[%s5 + $0x24] sm:$0xf] %v663
    %696 = vst [vmem:[%s5 + $0x28] sm:$0xf] %v664
    %697 = vst [vmem:[%s5 + $0x2c] sm:$0xf] %v665
    %698 = vst [vmem:[%s5 + $0x30] sm:$0xf] %v666
    %699 = vst [vmem:[%s5 + $0x34] sm:$0xf] %v667
    %700 = vst [vmem:[%s5 + $0x38] sm:$0xf] %v668
    %701 = vst [vmem:[%s5 + $0x3c] sm:$0xf] %v669
  $region29: #{gcn_forward.4} parent=0 // pred_fallthru
    _
  // Predicated region
  $region30: #{gcn_forward.4} parent=0 // pred_check
    _
  $region31: #{gcn_forward.4} parent=0 // pred_check_branch
    %703 = sbr.rel (0) target = $region33
  $region32: #{gcn_forward.4} parent=0 // pred_region
    _
  $region33: #{gcn_forward.4} parent=0 // pred_fallthru
    _
  // Predicated region
  $region34: #{gcn_forward.4} parent=0 // pred_check
    _
  $region35: #{gcn_forward.4} parent=0 // pred_check_branch
    %705 = sbr.rel (0) target = $region37
  $region36: #{gcn_forward.4} parent=0 // pred_region
    _
  $region37: #{gcn_forward.4} parent=0 // pred_fallthru
    _

</llo_original>
